<compile_context>
chip_gen: v6e
topology: v6e:2x2x1
jax: 0.10.0
libtpu: 0.0.40
codegen_flags: <defaults>
</compile_context>

<pallas_src>
import functools
import math

import jax
import jax.numpy as jnp
from jax.experimental import pallas as pl
from jax.experimental.pallas import tpu as pltpu


def _round_up(a, b):
    return (a + b - 1) // b * b


def _arc_kernel(x_ref, w_ref, winv_ref, o_ref, xinv_ref, cos_ref, *,
                cos_m, sin_m, s, tc, n_c_tiles, pad_cols):
    j = pl.program_id(1)

    # Per row-tile: inverse L2 norm of the (un-normalized) x rows, computed once.
    @pl.when(j == 0)
    def _():
        x = x_ref[...]                                        # (TM, F) f32
        nrm = jnp.sqrt(jnp.sum(x * x, axis=1, keepdims=True))
        xinv_ref[...] = 1.0 / jnp.maximum(nrm, 1e-12)         # clamp matches F.normalize eps

    # Raw matmul on the MXU, then a single fused scale:
    #   cos = (x @ w) * (1/||x_row||) * (0.1/||w_col||)       (0.1 folded into winv)
    raw = jnp.dot(x_ref[...], w_ref[...], preferred_element_type=jnp.float32)
    cos_ref[j] = raw * (xinv_ref[...] * winv_ref[...])        # (TM, TC)

    # Epilogue once per row tile, after all class tiles of cos are available.
    @pl.when(j == pl.num_programs(1) - 1)
    def _():
        # Pass 1: per-tile e = exp(s*cos), z = log(top) = s*cos(arccos(cos)+m),
        # and the full-row sum of e.  Stash e (in the cos slab) and z (in the
        # resident output block) for pass 2.
        row_sum = None
        for jj in range(n_c_tiles):
            c = cos_ref[jj]                                   # (TM, TC)
            e = jnp.exp(s * c)
            sin_a = jnp.sqrt(jnp.maximum(1.0 - c * c, 0.0))
            z = s * (c * cos_m - sin_a * sin_m)               # log(top)
            part = jnp.sum(e, axis=1, keepdims=True)
            row_sum = part if row_sum is None else row_sum + part
            cos_ref[jj] = e
            o_ref[:, jj * tc:(jj + 1) * tc] = z
        # Zero-padded class columns have cos == 0 exactly, so each contributed
        # exp(0) == 1 to the row sum; remove them exactly.
        row_sum = row_sum - pad_cols

        # Pass 2: out = z - log(top + sum(e) - e)   (== log(top/down))
        for jj in range(n_c_tiles):
            e = cos_ref[jj]
            z = o_ref[:, jj * tc:(jj + 1) * tc]
            down = jnp.exp(z) + (row_sum - e)
            o_ref[:, jj * tc:(jj + 1) * tc] = z - jnp.log(down)


def arc_forward(x, w, m=1, s=10, tm=128, tc=512):
    """Pallas TPU implementation of Arc.forward(x, m, s) with weight w."""
    n, feat = x.shape
    feat2, c = w.shape
    assert feat == feat2
    assert tm % 8 == 0 and tc % 128 == 0

    x = x.astype(jnp.float32)
    w = w.astype(jnp.float32)

    # Tile / padding geometry. Class tiles are lane-dense multiples of 128,
    # rows padded up to TM (default 128) for full MXU passes.
    tc = min(tc, _round_up(c, 128))
    n_pad = _round_up(n, tm)
    c_pad = _round_up(c, tc)
    n_c_tiles = c_pad // tc

    x_p = jnp.pad(x, ((0, n_pad - n), (0, 0))) if n_pad != n else x
    w_p = jnp.pad(w, ((0, 0), (0, c_pad - c))) if c_pad != c else w

    # Precompute per-column inverse norms (with the /10 folded in) once in XLA.
    w_nrm = jnp.sqrt(jnp.sum(w_p * w_p, axis=0, keepdims=True))
    winv = (0.1 / jnp.maximum(w_nrm, 1e-12)).astype(jnp.float32)   # (1, c_pad)

    cos_m = math.cos(m)
    sin_m = math.sin(m)
    kernel = functools.partial(
        _arc_kernel, cos_m=cos_m, sin_m=sin_m, s=float(s),
        tc=tc, n_c_tiles=n_c_tiles, pad_cols=float(c_pad - c))

    # Generous VMEM budget: resident output slab + cos slab + double-buffered
    # x / w / winv tiles, with headroom; clamp to stay within v7x physical VMEM.
    est = 4 * (2 * tm * c_pad + n_c_tiles * tm * tc
               + 2 * tm * feat + 2 * feat * tc + 2 * 8 * tc + tm * 128)
    vmem_limit = int(min(max(2 * est, 16 * 1024 * 1024), 100 * 1024 * 1024))

    grid = (n_pad // tm, c_pad // tc)

    out_p = pl.pallas_call(
        kernel,
        out_shape=jax.ShapeDtypeStruct((n_pad, c_pad), jnp.float32),
        grid_spec=pltpu.PrefetchScalarGridSpec(
            num_scalar_prefetch=0,
            grid=grid,
            in_specs=[
                pl.BlockSpec((tm, feat), lambda i, j: (i, 0)),   # x rows
                pl.BlockSpec((feat, tc), lambda i, j: (0, j)),   # w class tile
                pl.BlockSpec((1, tc), lambda i, j: (0, j)),      # 0.1/||w_col||
            ],
            out_specs=pl.BlockSpec((tm, c_pad), lambda i, j: (i, 0)),  # resident row slab
            scratch_shapes=[
                pltpu.VMEM((tm, 1), jnp.float32),                # 1/||x_row||
                pltpu.VMEM((n_c_tiles, tm, tc), jnp.float32),    # cos / e slab
            ],
        ),
        compiler_params=pltpu.CompilerParams(
            dimension_semantics=("parallel", "arbitrary"),
            vmem_limit_bytes=vmem_limit,
        ),
    )(x_p, w_p, winv)

    return out_p[:n, :c]


def arc_forward_ref(x, w, m=1, s=10):
    """Pure-JAX reference mirroring the PyTorch code literally."""
    x_n = x / jnp.maximum(jnp.linalg.norm(x, axis=1, keepdims=True), 1e-12)
    w_n = w / jnp.maximum(jnp.linalg.norm(w, axis=0, keepdims=True), 1e-12)
    cos = jnp.matmul(x_n, w_n) / 10.0
    a = jnp.arccos(cos)
    top = jnp.exp(s * jnp.cos(a + m))
    down = top + jnp.sum(jnp.exp(s * cos), axis=1, keepdims=True) - jnp.exp(s * cos)
    return jnp.log(top / down)


if __name__ == "__main__":
    # Small synthetic shapes: batch=8, feat_num=32, cls_num=300.
    # cls_num=300 with tc=128 exercises multi-tile class accumulation plus the
    # row (8 -> 128) and column (300 -> 384) padding paths.
    key = jax.random.PRNGKey(0)
    kx, kw = jax.random.split(key)
    N, FEAT, CLS = 8, 32, 300
    x = jax.random.normal(kx, (N, FEAT), dtype=jnp.float32)
    w = jax.random.normal(kw, (FEAT, CLS), dtype=jnp.float32)   # Parameter ~ randn(feat, cls)

    out = arc_forward(x, w, m=1, s=10, tm=128, tc=128)
    out = jax.block_until_ready(out)

    ref = arc_forward_ref(x, w, m=1, s=10)
    assert out.shape == (N, CLS) and out.dtype == jnp.float32
    max_err = float(jnp.max(jnp.abs(out - ref)))
    assert jnp.allclose(out, ref, atol=1e-4, rtol=1e-4), f"mismatch vs reference (max abs err {max_err})"

    print("KERNEL_OK")
</pallas_src>

<mosaic_0001>
module attributes {stable_mosaic.version = 11 : i64} {
  func.func @_arc_kernel(%arg0: i32, %arg1: i32, %arg2: memref<128x32xf32, #tpu.memory_space<vmem>>, %arg3: memref<32x128xf32, #tpu.memory_space<vmem>>, %arg4: memref<1x128xf32, #tpu.memory_space<vmem>>, %arg5: memref<128x384xf32, #tpu.memory_space<vmem>>, %arg6: memref<128x1xf32, #tpu.memory_space<vmem>>, %arg7: memref<3x128x128xf32, #tpu.memory_space<vmem>>) attributes {dimension_semantics = [#tpu.dimension_semantics<parallel>, #tpu.dimension_semantics<arbitrary>], iteration_bounds = array<i64: 1, 3>, scalar_prefetch = 0 : i64, scratch_operands = 2 : i64, tpu.core_type = #tpu.core_type<tc>, window_params = [{transform_indices = @transform_0, window_bounds = array<i64: 128, 32>}, {transform_indices = @transform_1, window_bounds = array<i64: 32, 128>}, {transform_indices = @transform_2, window_bounds = array<i64: 1, 128>}, {transform_indices = @transform_3, window_bounds = array<i64: 128, 384>}]} {
    %c0_i32 = arith.constant 0 : i32
    %0 = arith.cmpi eq, %arg1, %c0_i32 : i32
    %1 = arith.extui %0 : i1 to i32
    %c0_i32_0 = arith.constant 0 : i32
    %2 = arith.cmpi ne, %1, %c0_i32_0 : i32
    scf.if %2 {
      %c0_11 = arith.constant 0 : index
      %c0_12 = arith.constant 0 : index
      %19 = vector.load %arg2[%c0_11, %c0_12] : memref<128x32xf32, #tpu.memory_space<vmem>>, vector<128x32xf32>
      %20 = arith.mulf %19, %19 : vector<128x32xf32>
      %cst_13 = arith.constant dense<0.000000e+00> : vector<128xf32>
      %21 = vector.multi_reduction <add>, %20, %cst_13 [1] : vector<128x32xf32> to vector<128xf32>
      %22 = vector.shape_cast %21 : vector<128xf32> to vector<128x1xf32>
      %23 = math.sqrt %22 : vector<128x1xf32>
      %cst_14 = arith.constant 9.99999996E-13 : f32
      %24 = vector.broadcast %cst_14 : f32 to vector<128x1xf32>
      %25 = arith.maximumf %23, %24 : vector<128x1xf32>
      %cst_15 = arith.constant 1.000000e+00 : f32
      %26 = vector.broadcast %cst_15 : f32 to vector<128x1xf32>
      %27 = arith.divf %26, %25 : vector<128x1xf32>
      %c0_16 = arith.constant 0 : index
      %c0_17 = arith.constant 0 : index
      %28 = vector.load %arg6[%c0_16, %c0_17] : memref<128x1xf32, #tpu.memory_space<vmem>>, vector<128x1xf32>
      tpu.vector_store %arg6[%c0_16, %c0_17], %27 {strides = array<i32>} : memref<128x1xf32, #tpu.memory_space<vmem>>, vector<128x1xf32>,
    } else {
    }
    %c0 = arith.constant 0 : index
    %c0_1 = arith.constant 0 : index
    %3 = vector.load %arg2[%c0, %c0_1] : memref<128x32xf32, #tpu.memory_space<vmem>>, vector<128x32xf32>
    %c0_2 = arith.constant 0 : index
    %c0_3 = arith.constant 0 : index
    %4 = vector.load %arg3[%c0_2, %c0_3] : memref<32x128xf32, #tpu.memory_space<vmem>>, vector<32x128xf32>
    %cst = arith.constant dense<0.000000e+00> : vector<128x128xf32>
    %5 = tpu.matmul %3, %4, %cst {dimension_numbers = #tpu.dot_dimension_numbers<[1], [0], [0], [1], [0, 0, 1, 1], [], []>} : vector<128x32xf32>, vector<32x128xf32>, vector<128x128xf32> -> vector<128x128xf32>
    %c0_4 = arith.constant 0 : index
    %c0_5 = arith.constant 0 : index
    %6 = vector.load %arg6[%c0_4, %c0_5] : memref<128x1xf32, #tpu.memory_space<vmem>>, vector<128x1xf32>
    %c0_6 = arith.constant 0 : index
    %c0_7 = arith.constant 0 : index
    %7 = vector.load %arg4[%c0_6, %c0_7] : memref<1x128xf32, #tpu.memory_space<vmem>>, vector<1x128xf32>
    %8 = vector.broadcast %6 : vector<128x1xf32> to vector<128x128xf32>
    %9 = vector.broadcast %7 : vector<1x128xf32> to vector<128x128xf32>
    %10 = arith.mulf %8, %9 : vector<128x128xf32>
    %11 = arith.mulf %5, %10 : vector<128x128xf32>
    %12 = arith.index_cast %arg1 : i32 to index
    %c0_8 = arith.constant 0 : index
    %c0_9 = arith.constant 0 : index
    %13 = vector.load %arg7[%12, %c0_8, %c0_9] : memref<3x128x128xf32, #tpu.memory_space<vmem>>, vector<1x128x128xf32>
    %14 = vector.shape_cast %13 : vector<1x128x128xf32> to vector<128x128xf32>
    %15 = vector.shape_cast %11 : vector<128x128xf32> to vector<1x128x128xf32>
    tpu.vector_store %arg7[%12, %c0_8, %c0_9], %15 {strides = array<i32>} : memref<3x128x128xf32, #tpu.memory_space<vmem>>, vector<1x128x128xf32>,
    %c2_i32 = arith.constant 2 : i32
    %16 = arith.cmpi eq, %arg1, %c2_i32 : i32
    %17 = arith.extui %16 : i1 to i32
    %c0_i32_10 = arith.constant 0 : i32
    %18 = arith.cmpi ne, %17, %c0_i32_10 : i32
    scf.if %18 {
      %c0_11 = arith.constant 0 : index
      %c0_12 = arith.constant 0 : index
      %c0_13 = arith.constant 0 : index
      %19 = vector.load %arg7[%c0_11, %c0_12, %c0_13] : memref<3x128x128xf32, #tpu.memory_space<vmem>>, vector<1x128x128xf32>
      %20 = vector.shape_cast %19 : vector<1x128x128xf32> to vector<128x128xf32>
      %cst_14 = arith.constant 1.000000e+01 : f32
      %21 = vector.broadcast %cst_14 : f32 to vector<128x128xf32>
      %22 = arith.mulf %21, %20 : vector<128x128xf32>
      %23 = math.exp %22 : vector<128x128xf32>
      %24 = arith.mulf %20, %20 : vector<128x128xf32>
      %cst_15 = arith.constant 1.000000e+00 : f32
      %25 = vector.broadcast %cst_15 : f32 to vector<128x128xf32>
      %26 = arith.subf %25, %24 : vector<128x128xf32>
      %cst_16 = arith.constant 0.000000e+00 : f32
      %27 = vector.broadcast %cst_16 : f32 to vector<128x128xf32>
      %28 = arith.maximumf %26, %27 : vector<128x128xf32>
      %29 = math.sqrt %28 : vector<128x128xf32>
      %cst_17 = arith.constant 0.540302277 : f32
      %30 = vector.broadcast %cst_17 : f32 to vector<128x128xf32>
      %31 = arith.mulf %20, %30 : vector<128x128xf32>
      %cst_18 = arith.constant 0.841470957 : f32
      %32 = vector.broadcast %cst_18 : f32 to vector<128x128xf32>
      %33 = arith.mulf %29, %32 : vector<128x128xf32>
      %34 = arith.subf %31, %33 : vector<128x128xf32>
      %cst_19 = arith.constant 1.000000e+01 : f32
      %35 = vector.broadcast %cst_19 : f32 to vector<128x128xf32>
      %36 = arith.mulf %35, %34 : vector<128x128xf32>
      %cst_20 = arith.constant dense<0.000000e+00> : vector<128xf32>
      %37 = vector.multi_reduction <add>, %23, %cst_20 [1] : vector<128x128xf32> to vector<128xf32>
      %38 = vector.shape_cast %37 : vector<128xf32> to vector<128x1xf32>
      %c0_21 = arith.constant 0 : index
      %c0_22 = arith.constant 0 : index
      %c0_23 = arith.constant 0 : index
      %39 = vector.load %arg7[%c0_21, %c0_22, %c0_23] : memref<3x128x128xf32, #tpu.memory_space<vmem>>, vector<1x128x128xf32>
      %40 = vector.shape_cast %39 : vector<1x128x128xf32> to vector<128x128xf32>
      %41 = vector.shape_cast %23 : vector<128x128xf32> to vector<1x128x128xf32>
      tpu.vector_store %arg7[%c0_21, %c0_22, %c0_23], %41 {strides = array<i32>} : memref<3x128x128xf32, #tpu.memory_space<vmem>>, vector<1x128x128xf32>,
      %c0_24 = arith.constant 0 : index
      %c0_25 = arith.constant 0 : index
      %42 = vector.load %arg5[%c0_24, %c0_25] : memref<128x384xf32, #tpu.memory_space<vmem>>, vector<128x128xf32>
      tpu.vector_store %arg5[%c0_24, %c0_25], %36 {strides = array<i32>} : memref<128x384xf32, #tpu.memory_space<vmem>>, vector<128x128xf32>,
      %c1 = arith.constant 1 : index
      %c0_26 = arith.constant 0 : index
      %c0_27 = arith.constant 0 : index
      %43 = vector.load %arg7[%c1, %c0_26, %c0_27] : memref<3x128x128xf32, #tpu.memory_space<vmem>>, vector<1x128x128xf32>
      %44 = vector.shape_cast %43 : vector<1x128x128xf32> to vector<128x128xf32>
      %cst_28 = arith.constant 1.000000e+01 : f32
      %45 = vector.broadcast %cst_28 : f32 to vector<128x128xf32>
      %46 = arith.mulf %45, %44 : vector<128x128xf32>
      %47 = math.exp %46 : vector<128x128xf32>
      %48 = arith.mulf %44, %44 : vector<128x128xf32>
      %cst_29 = arith.constant 1.000000e+00 : f32
      %49 = vector.broadcast %cst_29 : f32 to vector<128x128xf32>
      %50 = arith.subf %49, %48 : vector<128x128xf32>
      %cst_30 = arith.constant 0.000000e+00 : f32
      %51 = vector.broadcast %cst_30 : f32 to vector<128x128xf32>
      %52 = arith.maximumf %50, %51 : vector<128x128xf32>
      %53 = math.sqrt %52 : vector<128x128xf32>
      %cst_31 = arith.constant 0.540302277 : f32
      %54 = vector.broadcast %cst_31 : f32 to vector<128x128xf32>
      %55 = arith.mulf %44, %54 : vector<128x128xf32>
      %cst_32 = arith.constant 0.841470957 : f32
      %56 = vector.broadcast %cst_32 : f32 to vector<128x128xf32>
      %57 = arith.mulf %53, %56 : vector<128x128xf32>
      %58 = arith.subf %55, %57 : vector<128x128xf32>
      %cst_33 = arith.constant 1.000000e+01 : f32
      %59 = vector.broadcast %cst_33 : f32 to vector<128x128xf32>
      %60 = arith.mulf %59, %58 : vector<128x128xf32>
      %cst_34 = arith.constant dense<0.000000e+00> : vector<128xf32>
      %61 = vector.multi_reduction <add>, %47, %cst_34 [1] : vector<128x128xf32> to vector<128xf32>
      %62 = vector.shape_cast %61 : vector<128xf32> to vector<128x1xf32>
      %63 = arith.addf %38, %62 : vector<128x1xf32>
      %c1_35 = arith.constant 1 : index
      %c0_36 = arith.constant 0 : index
      %c0_37 = arith.constant 0 : index
      %64 = vector.load %arg7[%c1_35, %c0_36, %c0_37] : memref<3x128x128xf32, #tpu.memory_space<vmem>>, vector<1x128x128xf32>
      %65 = vector.shape_cast %64 : vector<1x128x128xf32> to vector<128x128xf32>
      %66 = vector.shape_cast %47 : vector<128x128xf32> to vector<1x128x128xf32>
      tpu.vector_store %arg7[%c1_35, %c0_36, %c0_37], %66 {strides = array<i32>} : memref<3x128x128xf32, #tpu.memory_space<vmem>>, vector<1x128x128xf32>,
      %c0_38 = arith.constant 0 : index
      %c128 = arith.constant 128 : index
      %67 = vector.load %arg5[%c0_38, %c128] : memref<128x384xf32, #tpu.memory_space<vmem>>, vector<128x128xf32>
      tpu.vector_store %arg5[%c0_38, %c128], %60 {strides = array<i32>} : memref<128x384xf32, #tpu.memory_space<vmem>>, vector<128x128xf32>,
      %c2 = arith.constant 2 : index
      %c0_39 = arith.constant 0 : index
      %c0_40 = arith.constant 0 : index
      %68 = vector.load %arg7[%c2, %c0_39, %c0_40] : memref<3x128x128xf32, #tpu.memory_space<vmem>>, vector<1x128x128xf32>
      %69 = vector.shape_cast %68 : vector<1x128x128xf32> to vector<128x128xf32>
      %cst_41 = arith.constant 1.000000e+01 : f32
      %70 = vector.broadcast %cst_41 : f32 to vector<128x128xf32>
      %71 = arith.mulf %70, %69 : vector<128x128xf32>
      %72 = math.exp %71 : vector<128x128xf32>
      %73 = arith.mulf %69, %69 : vector<128x128xf32>
      %cst_42 = arith.constant 1.000000e+00 : f32
      %74 = vector.broadcast %cst_42 : f32 to vector<128x128xf32>
      %75 = arith.subf %74, %73 : vector<128x128xf32>
      %cst_43 = arith.constant 0.000000e+00 : f32
      %76 = vector.broadcast %cst_43 : f32 to vector<128x128xf32>
      %77 = arith.maximumf %75, %76 : vector<128x128xf32>
      %78 = math.sqrt %77 : vector<128x128xf32>
      %cst_44 = arith.constant 0.540302277 : f32
      %79 = vector.broadcast %cst_44 : f32 to vector<128x128xf32>
      %80 = arith.mulf %69, %79 : vector<128x128xf32>
      %cst_45 = arith.constant 0.841470957 : f32
      %81 = vector.broadcast %cst_45 : f32 to vector<128x128xf32>
      %82 = arith.mulf %78, %81 : vector<128x128xf32>
      %83 = arith.subf %80, %82 : vector<128x128xf32>
      %cst_46 = arith.constant 1.000000e+01 : f32
      %84 = vector.broadcast %cst_46 : f32 to vector<128x128xf32>
      %85 = arith.mulf %84, %83 : vector<128x128xf32>
      %cst_47 = arith.constant dense<0.000000e+00> : vector<128xf32>
      %86 = vector.multi_reduction <add>, %72, %cst_47 [1] : vector<128x128xf32> to vector<128xf32>
      %87 = vector.shape_cast %86 : vector<128xf32> to vector<128x1xf32>
      %88 = arith.addf %63, %87 : vector<128x1xf32>
      %c2_48 = arith.constant 2 : index
      %c0_49 = arith.constant 0 : index
      %c0_50 = arith.constant 0 : index
      %89 = vector.load %arg7[%c2_48, %c0_49, %c0_50] : memref<3x128x128xf32, #tpu.memory_space<vmem>>, vector<1x128x128xf32>
      %90 = vector.shape_cast %89 : vector<1x128x128xf32> to vector<128x128xf32>
      %91 = vector.shape_cast %72 : vector<128x128xf32> to vector<1x128x128xf32>
      tpu.vector_store %arg7[%c2_48, %c0_49, %c0_50], %91 {strides = array<i32>} : memref<3x128x128xf32, #tpu.memory_space<vmem>>, vector<1x128x128xf32>,
      %c0_51 = arith.constant 0 : index
      %c256 = arith.constant 256 : index
      %92 = vector.load %arg5[%c0_51, %c256] : memref<128x384xf32, #tpu.memory_space<vmem>>, vector<128x128xf32>
      tpu.vector_store %arg5[%c0_51, %c256], %85 {strides = array<i32>} : memref<128x384xf32, #tpu.memory_space<vmem>>, vector<128x128xf32>,
      %cst_52 = arith.constant 8.400000e+01 : f32
      %93 = vector.broadcast %cst_52 : f32 to vector<128x1xf32>
      %94 = arith.subf %88, %93 : vector<128x1xf32>
      %c0_53 = arith.constant 0 : index
      %c0_54 = arith.constant 0 : index
      %c0_55 = arith.constant 0 : index
      %95 = vector.load %arg7[%c0_53, %c0_54, %c0_55] : memref<3x128x128xf32, #tpu.memory_space<vmem>>, vector<1x128x128xf32>
      %96 = vector.shape_cast %95 : vector<1x128x128xf32> to vector<128x128xf32>
      %c0_56 = arith.constant 0 : index
      %c0_57 = arith.constant 0 : index
      %97 = vector.load %arg5[%c0_56, %c0_57] : memref<128x384xf32, #tpu.memory_space<vmem>>, vector<128x128xf32>
      %98 = math.exp %97 : vector<128x128xf32>
      %99 = vector.broadcast %94 : vector<128x1xf32> to vector<128x128xf32>
      %100 = arith.subf %99, %96 : vector<128x128xf32>
      %101 = arith.addf %98, %100 : vector<128x128xf32>
      %102 = math.log %101 : vector<128x128xf32>
      %103 = arith.subf %97, %102 : vector<128x128xf32>
      %c0_58 = arith.constant 0 : index
      %c0_59 = arith.constant 0 : index
      %104 = vector.load %arg5[%c0_58, %c0_59] : memref<128x384xf32, #tpu.memory_space<vmem>>, vector<128x128xf32>
      tpu.vector_store %arg5[%c0_58, %c0_59], %103 {strides = array<i32>} : memref<128x384xf32, #tpu.memory_space<vmem>>, vector<128x128xf32>,
      %c1_60 = arith.constant 1 : index
      %c0_61 = arith.constant 0 : index
      %c0_62 = arith.constant 0 : index
      %105 = vector.load %arg7[%c1_60, %c0_61, %c0_62] : memref<3x128x128xf32, #tpu.memory_space<vmem>>, vector<1x128x128xf32>
      %106 = vector.shape_cast %105 : vector<1x128x128xf32> to vector<128x128xf32>
      %c0_63 = arith.constant 0 : index
      %c128_64 = arith.constant 128 : index
      %107 = vector.load %arg5[%c0_63, %c128_64] : memref<128x384xf32, #tpu.memory_space<vmem>>, vector<128x128xf32>
      %108 = math.exp %107 : vector<128x128xf32>
      %109 = vector.broadcast %94 : vector<128x1xf32> to vector<128x128xf32>
      %110 = arith.subf %109, %106 : vector<128x128xf32>
      %111 = arith.addf %108, %110 : vector<128x128xf32>
      %112 = math.log %111 : vector<128x128xf32>
      %113 = arith.subf %107, %112 : vector<128x128xf32>
      %c0_65 = arith.constant 0 : index
      %c128_66 = arith.constant 128 : index
      %114 = vector.load %arg5[%c0_65, %c128_66] : memref<128x384xf32, #tpu.memory_space<vmem>>, vector<128x128xf32>
      tpu.vector_store %arg5[%c0_65, %c128_66], %113 {strides = array<i32>} : memref<128x384xf32, #tpu.memory_space<vmem>>, vector<128x128xf32>,
      %c2_67 = arith.constant 2 : index
      %c0_68 = arith.constant 0 : index
      %c0_69 = arith.constant 0 : index
      %115 = vector.load %arg7[%c2_67, %c0_68, %c0_69] : memref<3x128x128xf32, #tpu.memory_space<vmem>>, vector<1x128x128xf32>
      %116 = vector.shape_cast %115 : vector<1x128x128xf32> to vector<128x128xf32>
      %c0_70 = arith.constant 0 : index
      %c256_71 = arith.constant 256 : index
      %117 = vector.load %arg5[%c0_70, %c256_71] : memref<128x384xf32, #tpu.memory_space<vmem>>, vector<128x128xf32>
      %118 = math.exp %117 : vector<128x128xf32>
      %119 = vector.broadcast %94 : vector<128x1xf32> to vector<128x128xf32>
      %120 = arith.subf %119, %116 : vector<128x128xf32>
      %121 = arith.addf %118, %120 : vector<128x128xf32>
      %122 = math.log %121 : vector<128x128xf32>
      %123 = arith.subf %117, %122 : vector<128x128xf32>
      %c0_72 = arith.constant 0 : index
      %c256_73 = arith.constant 256 : index
      %124 = vector.load %arg5[%c0_72, %c256_73] : memref<128x384xf32, #tpu.memory_space<vmem>>, vector<128x128xf32>
      tpu.vector_store %arg5[%c0_72, %c256_73], %123 {strides = array<i32>} : memref<128x384xf32, #tpu.memory_space<vmem>>, vector<128x128xf32>,
    } else {
    }
    return
  }
  func.func @transform_0(%arg0: i32, %arg1: i32) -> (i32, i32) {
    %c0_i32 = arith.constant 0 : i32
    %c0_i32_0 = arith.constant 0 : i32
    return %arg0, %c0_i32 : i32, i32
  }
  func.func @transform_1(%arg0: i32, %arg1: i32) -> (i32, i32) {
    %c0_i32 = arith.constant 0 : i32
    %c0_i32_0 = arith.constant 0 : i32
    return %c0_i32, %arg1 : i32, i32
  }
  func.func @transform_2(%arg0: i32, %arg1: i32) -> (i32, i32) {
    %c0_i32 = arith.constant 0 : i32
    %c0_i32_0 = arith.constant 0 : i32
    return %c0_i32, %arg1 : i32, i32
  }
  func.func @transform_3(%arg0: i32, %arg1: i32) -> (i32, i32) {
    %c0_i32 = arith.constant 0 : i32
    %c0_i32_0 = arith.constant 0 : i32
    return %arg0, %c0_i32 : i32, i32
  }
}

</mosaic_0001>

<llo_original>
// kernel: tpu_custom_call.1
$region0: #{tpu_custom_call.1}
  #allocation0 [shape = 'u32[]', space=smem, size = 0x4, offset = 0x4, fixed_abs, tag = 'smem constant byte address 0x4 - core index']
  #allocation1 [shape = 'u32[144,128]{1,0:T(1,128)}', space=vmem, size = 0x12000, scoped, tag = 'internal scratch']
  #allocation2 [shape = 'f32[128,1]{1,0:T(8,128)}', space=vmem, size = 0x10000, scoped, tag = 'scratch operand']
  #allocation3 [shape = 'f32[3,128,128]{2,1,0:T(8,128)}', space=vmem, size = 0x30000, scoped, tag = 'scratch operand']
  %s0 = inlined_call_operand.vmem [shape: f32[128,32], index: 0, kind: input, shape index: {}]
  %s1 = inlined_call_operand.vmem [shape: f32[32,384], index: 1, kind: input, shape index: {}]
  %s2 = inlined_call_operand.vmem [shape: f32[1,384], index: 2, kind: input, shape index: {}]
  %s3 = inlined_call_operand.hbm [shape: f32[128,384], index: 3, kind: output, shape index: {}]
  %s4 = sld [smem:[#allocation0]]
  $region91: #{tpu_custom_call.1} parent=0
    _
  %s6 = ssub.s32 1, %s4
  %s7 = scalar_select 0, %s6, %s4
  $region1: #{tpu_custom_call.1} parent=0
    #allocation4 [shape = 'u8[32768]{0}', space=vmem, size = 0x8000, scoped, tag = 'input window, operand 1']
    #allocation5 [shape = 'u8[196608]{0}', space=vmem, size = 0x30000, scoped, tag = 'output window, operand 0, single buffered']
    #allocation6 [shape = 's32[2]{0}', space=sflag, size = 0x8, scoped, tag = 'scoped memory for tpu_custom_call.1']
    %8 = vsyncpa [#allocation6], 0
    loop: start=0, step=1, limit=5
    $region2: #{tpu_custom_call.1} parent=1 // loop_pre_header
      _
    $region3: #{tpu_custom_call.1} parent=1 // loop_header
      %s10 = sphi 0, %s14
      %p11 = scmp.ge.s32.totalorder %s10, 5
      %s17 = sphi 0, %s29
      %s18 = sphi 0, %s25
      %s19 = sphi 0, %s17
      %s20 = sphi 0, %s18
      %s21 = sphi 0, %s19
      %s22 = sphi 0, %s20
      %s32 = sphi 0, %s34
      %s35 = sphi 0, %s32
      %s36 = sphi 0, %s35
      %s52 = sphi 0, %s36
      %s58 = sphi 0, %s60
      %s61 = sphi 0, %s58
      %s62 = sphi 0, %s61
      %s78 = sphi 0, %s62
      %s84 = sphi 0, %s86
      %s87 = sphi 0, %s84
      %s88 = sphi 0, %s87
      %s104 = sphi 0, %s88
      %s110 = sphi 0, %s112
      %s113 = sphi 0, %s110
      %s114 = sphi 0, %s113
      %s130 = sphi 0, %s114
    $region4: #{tpu_custom_call.1} parent=1 // loop_header_branch
      %13 = sbr.rel (%p11) target = $region8
    $region5: #{tpu_custom_call.1} parent=1 // loop_body
      %s15 = ssub.s32 %s10, 1
      %s16 = ssub.s32 %s10, 2
      %s23 = sadd.s32 1, %s18
      %p24 = scmp.ge.s32.totalorder %s23, 3
      %s25 = scalar_select %p24, 0, %s23
      %s26 = sadd.s32 1, %s17
      %s27 = scalar_select %p24, %s26, %s17
      %p28 = scmp.ge.s32.totalorder %s27, 1
      %s29 = scalar_select %p28, 0, %s27
      %s30 = ssub.s32 %s17, %s29
      %p31 = scmp.eq.s32.totalorder %s30, 0
      %s33 = sadd.s32 %s32, 1
      %s34 = scalar_select %p31, %s32, %s33
      %p37 = pneg %p31
      %p38 = scmp.eq.s32.totalorder %s10, 2
      %p39 = por %p37, %p38
      %p40 = scmp.ne.s32.totalorder %s32, %s35
      %p41 = scmp.eq.s32.totalorder %s10, 0
      %p42 = por %p40, %p41
      %p43 = scmp.ne.s32.totalorder %s32, %s35
      %p44 = scmp.eq.s32.totalorder %s15, 2
      %p45 = por %p43, %p44
      %p46 = scmp.ne.s32.totalorder %s35, %s36
      %p47 = scmp.eq.s32.totalorder %s15, 0
      %p48 = por %p46, %p47
      %p49 = scmp.ne.s32.totalorder %s35, %s36
      %p50 = scmp.eq.s32.totalorder %s16, 2
      %p51 = por %p49, %p50
      %p53 = scmp.ne.s32.totalorder %s36, %s52
      %p54 = scmp.eq.s32.totalorder %s16, 0
      %p55 = por %p53, %p54
      %s56 = ssub.s32 %s18, %s25
      %p57 = scmp.eq.s32.totalorder %s56, 0
      %s59 = sadd.s32 %s58, 1
      %s60 = scalar_select %p57, %s58, %s59
      %p63 = pneg %p57
      %p64 = scmp.eq.s32.totalorder %s10, 2
      %p65 = por %p63, %p64
      %p66 = scmp.ne.s32.totalorder %s58, %s61
      %p67 = scmp.eq.s32.totalorder %s10, 0
      %p68 = por %p66, %p67
      %p69 = scmp.ne.s32.totalorder %s58, %s61
      %p70 = scmp.eq.s32.totalorder %s15, 2
      %p71 = por %p69, %p70
      %p72 = scmp.ne.s32.totalorder %s61, %s62
      %p73 = scmp.eq.s32.totalorder %s15, 0
      %p74 = por %p72, %p73
      %p75 = scmp.ne.s32.totalorder %s61, %s62
      %p76 = scmp.eq.s32.totalorder %s16, 2
      %p77 = por %p75, %p76
      %p79 = scmp.ne.s32.totalorder %s62, %s78
      %p80 = scmp.eq.s32.totalorder %s16, 0
      %p81 = por %p79, %p80
      %s82 = ssub.s32 %s18, %s25
      %p83 = scmp.eq.s32.totalorder %s82, 0
      %s85 = sadd.s32 %s84, 1
      %s86 = scalar_select %p83, %s84, %s85
      %p89 = pneg %p83
      %p90 = scmp.eq.s32.totalorder %s10, 2
      %p91 = por %p89, %p90
      %p92 = scmp.ne.s32.totalorder %s84, %s87
      %p93 = scmp.eq.s32.totalorder %s10, 0
      %p94 = por %p92, %p93
      %p95 = scmp.ne.s32.totalorder %s84, %s87
      %p96 = scmp.eq.s32.totalorder %s15, 2
      %p97 = por %p95, %p96
      %p98 = scmp.ne.s32.totalorder %s87, %s88
      %p99 = scmp.eq.s32.totalorder %s15, 0
      %p100 = por %p98, %p99
      %p101 = scmp.ne.s32.totalorder %s87, %s88
      %p102 = scmp.eq.s32.totalorder %s16, 2
      %p103 = por %p101, %p102
      %p105 = scmp.ne.s32.totalorder %s88, %s104
      %p106 = scmp.eq.s32.totalorder %s16, 0
      %p107 = por %p105, %p106
      %s108 = ssub.s32 %s17, %s29
      %p109 = scmp.eq.s32.totalorder %s108, 0
      %s111 = sadd.s32 %s110, 1
      %s112 = scalar_select %p109, %s110, %s111
      %p115 = pneg %p109
      %p116 = scmp.eq.s32.totalorder %s10, 2
      %p117 = por %p115, %p116
      %p118 = scmp.ne.s32.totalorder %s110, %s113
      %p119 = scmp.eq.s32.totalorder %s10, 0
      %p120 = por %p118, %p119
      %p121 = scmp.ne.s32.totalorder %s110, %s113
      %p122 = scmp.eq.s32.totalorder %s15, 2
      %p123 = por %p121, %p122
      %p124 = scmp.ne.s32.totalorder %s113, %s114
      %p125 = scmp.eq.s32.totalorder %s15, 0
      %p126 = por %p124, %p125
      %p127 = scmp.ne.s32.totalorder %s113, %s114
      %p128 = scmp.eq.s32.totalorder %s16, 2
      %p129 = por %p127, %p128
      %p131 = scmp.ne.s32.totalorder %s114, %s130
      %p132 = scmp.eq.s32.totalorder %s16, 0
      %p133 = por %p131, %p132
      %p134 = scmp.le.s32.totalorder 1, %s10
      %p135 = scmp.lt.s32.totalorder %s10, 4
      %p136 = pnand %p134, %p135
      %p137 = pneg %p136
      // Predicated region
      $region9: #{tpu_custom_call.1} parent=5 // pred_check
        _
      $region10: #{tpu_custom_call.1} parent=5 // pred_check_branch
        %139 = sbr.rel (%p136) target = $region12
      $region11: #{tpu_custom_call.1} parent=5 // pred_region
        %s140 = ssub.s32 %s10, 1
        // Predicated region
        $region13: #{tpu_custom_call.1} parent=11 // pred_check
          %p141 = pneg %p48
        $region14: #{tpu_custom_call.1} parent=11 // pred_check_branch
          %143 = sbr.rel (%p141) target = $region16
        $region15: #{tpu_custom_call.1} parent=11 // pred_region
          %s144 = smul.u32 16, %s19
          %p145 = scmp.lt.s32.totalorder %s144, 15
          %s146 = scalar_select %p145, %s144, 15
          %s147 = smul.addr %s146, 8
          %s148 = scalar_lea.vmem %s0, %s147
          %s149 = smul.u32 16, %s19
        $region16: #{tpu_custom_call.1} parent=11 // pred_fallthru
          _
      $region12: #{tpu_custom_call.1} parent=5 // pred_fallthru
        _
      %p150 = scmp.lt.s32.totalorder %s10, 3
      // Predicated region
      $region17: #{tpu_custom_call.1} parent=5 // pred_check
        %p151 = pneg %p150
      $region18: #{tpu_custom_call.1} parent=5 // pred_check_branch
        %153 = sbr.rel (%p151) target = $region20
      $region19: #{tpu_custom_call.1} parent=5 // pred_region
        // Predicated region
        $region21: #{tpu_custom_call.1} parent=19 // pred_check
          %p154 = pneg %p68
        $region22: #{tpu_custom_call.1} parent=19 // pred_check_branch
          %156 = sbr.rel (%p154) target = $region24
        $region23: #{tpu_custom_call.1} parent=19 // pred_region
          %s157 = sand.u32 %s58, 1
          %s158 = sand.u32 %s58, 1
          %s159 = smul.addr %s158, 32
          %s160 = scalar_lea.vmem [#allocation4], %s159
          %s161 = smul.addr %s18, 8
          %s162 = scalar_lea.vmem %s1, %s161
          // Predicated region
          $region25: #{tpu_custom_call.1} parent=23 // pred_check
            _
          $region26: #{tpu_custom_call.1} parent=23 // pred_check_branch
            %164 = sbr.rel (0) target = $region28
          $region27: #{tpu_custom_call.1} parent=23 // pred_region
            // Predicated region
            $region29: #{tpu_custom_call.1} parent=27 // pred_check
              _
            $region30: #{tpu_custom_call.1} parent=27 // pred_check_branch
              %166 = sbr.rel (0) target = $region32
            $region31: #{tpu_custom_call.1} parent=27 // pred_region
              // Predicated region
              $region44: #{tpu_custom_call.1} parent=31 // pred_check
                _
              $region45: #{tpu_custom_call.1} parent=31 // pred_check_branch
                %188 = sbr.rel (0) target = $region47
              $region46: #{tpu_custom_call.1} parent=31 // pred_region
                loop: start=0, step=1, limit=1
                $region48: #{tpu_custom_call.1} parent=46 // loop_pre_header
                  _
                $region49: #{tpu_custom_call.1} parent=46 // loop_header
                  %s190 = sphi 0, %s194
                  %p191 = scmp.ge.s32.totalorder %s190, 1
                  %s195 = sphi %s162, %s162
                  %s196 = sphi %s160, %s160
                $region50: #{tpu_custom_call.1} parent=46 // loop_header_branch
                  %193 = sbr.rel (%p191) target = $region54
                $region51: #{tpu_custom_call.1} parent=46 // loop_body
                  %v197 = vld [vmem:[%s195] sm:$0xff]
                  %198 = vst [vmem:[%s196] sm:$0xff] %v197
                  %v199 = vld [vmem:[%s195 + $0x18] sm:$0xff]
                  %200 = vst [vmem:[%s196 + $0x8] sm:$0xff] %v199
                  %v201 = vld [vmem:[%s195 + $0x30] sm:$0xff]
                  %202 = vst [vmem:[%s196 + $0x10] sm:$0xff] %v201
                  %v203 = vld [vmem:[%s195 + $0x48] sm:$0xff]
                  %204 = vst [vmem:[%s196 + $0x18] sm:$0xff] %v203
                $region52: #{tpu_custom_call.1} parent=46 // loop_footer
                  %s194 = sadd.s32 1, %s190
                $region53: #{tpu_custom_call.1} parent=46 // loop_footer_branch
                  %189 = sbr.rel target = $region49
                $region54: #{tpu_custom_call.1} parent=46 // loop_exit
                  _
              $region47: #{tpu_custom_call.1} parent=31 // pred_fallthru
                _
              // Predicated region
              $region55: #{tpu_custom_call.1} parent=31 // pred_check
                _
              $region56: #{tpu_custom_call.1} parent=31 // pred_check_branch
                %206 = sbr.rel target = $region58
              $region57: #{tpu_custom_call.1} parent=31 // pred_region
                _
              $region58: #{tpu_custom_call.1} parent=31 // pred_fallthru
                _
            $region32: #{tpu_custom_call.1} parent=27 // pred_fallthru
              _
            // Predicated region
            $region33: #{tpu_custom_call.1} parent=27 // pred_check
              _
            $region34: #{tpu_custom_call.1} parent=27 // pred_check_branch
              %168 = sbr.rel target = $region36
            $region35: #{tpu_custom_call.1} parent=27 // pred_region
              %s170 = ssub.s32 256, 1
              loop: start=0, step=1, limit=1
              $region37: #{tpu_custom_call.1} parent=35 // loop_pre_header
                _
              $region38: #{tpu_custom_call.1} parent=35 // loop_header
                %s172 = sphi 0, %s176
                %p173 = scmp.ge.s32.totalorder %s172, 1
                %s177 = sphi %s162, %s162
                %s178 = sphi %s160, %s160
              $region39: #{tpu_custom_call.1} parent=35 // loop_header_branch
                %175 = sbr.rel (%p173) target = $region43
              $region40: #{tpu_custom_call.1} parent=35 // loop_body
                %v179 = vld [vmem:[%s177] sm:%s170]
                %180 = vst [vmem:[%s178] sm:%s170] %v179
                %v181 = vld [vmem:[%s177 + $0x18] sm:%s170]
                %182 = vst [vmem:[%s178 + $0x8] sm:%s170] %v181
                %v183 = vld [vmem:[%s177 + $0x30] sm:%s170]
                %184 = vst [vmem:[%s178 + $0x10] sm:%s170] %v183
                %v185 = vld [vmem:[%s177 + $0x48] sm:%s170]
                %186 = vst [vmem:[%s178 + $0x18] sm:%s170] %v185
              $region41: #{tpu_custom_call.1} parent=35 // loop_footer
                %s176 = sadd.s32 1, %s172
              $region42: #{tpu_custom_call.1} parent=35 // loop_footer_branch
                %171 = sbr.rel target = $region38
              $region43: #{tpu_custom_call.1} parent=35 // loop_exit
                _
            $region36: #{tpu_custom_call.1} parent=27 // pred_fallthru
              _
          $region28: #{tpu_custom_call.1} parent=23 // pred_fallthru
            _
          %207 = vnop
        $region24: #{tpu_custom_call.1} parent=19 // pred_fallthru
          _
        // Predicated region
        $region59: #{tpu_custom_call.1} parent=19 // pred_check
          %p208 = pneg %p94
        $region60: #{tpu_custom_call.1} parent=19 // pred_check_branch
          %210 = sbr.rel (%p208) target = $region62
        $region61: #{tpu_custom_call.1} parent=19 // pred_region
          %p211 = scmp.lt.s32.totalorder %s18, 2
          %s212 = scalar_select %p211, %s18, 2
          %s213 = scalar_lea.vmem %s2, %s212
        $region62: #{tpu_custom_call.1} parent=19 // pred_fallthru
          _
      $region20: #{tpu_custom_call.1} parent=5 // pred_fallthru
        _
      %p214 = scmp.le.s32.totalorder 1, %s10
      %p215 = scmp.lt.s32.totalorder %s10, 4
      %p216 = pnand %p214, %p215
      %p217 = pneg %p216
      // Predicated region
      $region63: #{tpu_custom_call.1} parent=5 // pred_check
        _
      $region64: #{tpu_custom_call.1} parent=5 // pred_check_branch
        %219 = sbr.rel (%p216) target = $region66
      $region65: #{tpu_custom_call.1} parent=5 // pred_region
        %s220 = ssub.s32 %s10, 1
        %s221 = sand.u32 %s61, 1
        %s222 = sand.u32 %s61, 1
        %s223 = smul.addr %s222, 32
        %s224 = scalar_lea.vmem [#allocation4], %s223
        // Predicated region
        $region67: #{tpu_custom_call.1} parent=65 // pred_check
          %p225 = pneg %p74
        $region68: #{tpu_custom_call.1} parent=65 // pred_check_branch
          %227 = sbr.rel (%p225) target = $region70
        $region69: #{tpu_custom_call.1} parent=65 // pred_region
          _
        $region70: #{tpu_custom_call.1} parent=65 // pred_fallthru
          _
        %s228 = smul.u32 16, %s19
        %p229 = scmp.lt.s32.totalorder %s228, 15
        %s230 = scalar_select %p229, %s228, 15
        %s231 = smul.addr %s230, 8
        %s232 = scalar_lea.vmem %s0, %s231
        %p233 = pneg %p48
        %p234 = pneg %p45
        %s235 = sand.u32 %s61, 1
        %s236 = sand.u32 %s61, 1
        %s237 = smul.addr %s236, 32
        %s238 = scalar_lea.vmem [#allocation4], %s237
        %p239 = pneg %p74
        %p240 = pneg %p71
        %p241 = scmp.lt.s32.totalorder %s20, 2
        %s242 = scalar_select %p241, %s20, 2
        %s243 = scalar_lea.vmem %s2, %s242
        %p244 = pneg %p100
        %p245 = pneg %p97
        %p246 = pneg %p126
        %p247 = pneg %p123
        %s248 = smul.u32 16, %s19
        %p249 = scmp.lt.s32.totalorder %s248, 15
        %s250 = scalar_select %p249, %s248, 15
        %s251 = smul.addr %s250, 8
        %s252 = scalar_lea.vmem %s0, %s251
        %s253 = smul.u32 16, %s19
        %p254 = scmp.lt.s32.totalorder %s20, 2
        %s255 = scalar_select %p254, %s20, 2
        %s256 = scalar_lea.vmem %s2, %s255
        %s257 = smul.u32 16, %s19
        %p258 = scmp.eq.s32.totalorder %s20, 0
        // Predicated region
        $region71: #{tpu_custom_call.1} parent=65 // pred_check
          %p259 = pneg %p258
        $region72: #{tpu_custom_call.1} parent=65 // pred_check_branch
          %261 = sbr.rel (%p259) target = $region74
        $region73: #{tpu_custom_call.1} parent=65 // pred_region
          %v262 = vld [vmem:[%s252] sm:$0xff]
          %v263 = vld [vmem:[%s252 + $0x8] sm:$0xff]
          %v264 = vld [vmem:[%s252 + $0x10] sm:$0xff]
          %v265 = vld [vmem:[%s252 + $0x18] sm:$0xff]
          %v266 = vld [vmem:[%s252 + $0x20] sm:$0xff]
          %v267 = vld [vmem:[%s252 + $0x28] sm:$0xff]
          %v268 = vld [vmem:[%s252 + $0x30] sm:$0xff]
          %v269 = vld [vmem:[%s252 + $0x38] sm:$0xff]
          %v270 = vld [vmem:[%s252 + $0x40] sm:$0xff]
          %v271 = vld [vmem:[%s252 + $0x48] sm:$0xff]
          %v272 = vld [vmem:[%s252 + $0x50] sm:$0xff]
          %v273 = vld [vmem:[%s252 + $0x58] sm:$0xff]
          %v274 = vld [vmem:[%s252 + $0x60] sm:$0xff]
          %v275 = vld [vmem:[%s252 + $0x68] sm:$0xff]
          %v276 = vld [vmem:[%s252 + $0x70] sm:$0xff]
          %v277 = vld [vmem:[%s252 + $0x78] sm:$0xff]
          %v278 = vmul.f32 %v262, %v262
          %v279 = vmul.f32 %v263, %v263
          %v280 = vmul.f32 %v264, %v264
          %v281 = vmul.f32 %v265, %v265
          %v282 = vmul.f32 %v266, %v266
          %v283 = vmul.f32 %v267, %v267
          %v284 = vmul.f32 %v268, %v268
          %v285 = vmul.f32 %v269, %v269
          %v286 = vmul.f32 %v270, %v270
          %v287 = vmul.f32 %v271, %v271
          %v288 = vmul.f32 %v272, %v272
          %v289 = vmul.f32 %v273, %v273
          %v290 = vmul.f32 %v274, %v274
          %v291 = vmul.f32 %v275, %v275
          %v292 = vmul.f32 %v276, %v276
          %v293 = vmul.f32 %v277, %v277
          %vm294 = vcmask 261120
          %v295 = vsel %vm294, %v278, 0.0
          %296 = vadd.xlane.f32.xlu0 %v295
          %v297 = vpop.xlane.xlu0 %296
          %v298 = vsel %vm294, %v279, 0.0
          %299 = vadd.xlane.f32.xlu0 %v298
          %v300 = vpop.xlane.xlu0 %299
          %v301 = vsel %vm294, %v280, 0.0
          %302 = vadd.xlane.f32.xlu0 %v301
          %v303 = vpop.xlane.xlu0 %302
          %v304 = vsel %vm294, %v281, 0.0
          %305 = vadd.xlane.f32.xlu0 %v304
          %v306 = vpop.xlane.xlu0 %305
          %v307 = vsel %vm294, %v282, 0.0
          %308 = vadd.xlane.f32.xlu0 %v307
          %v309 = vpop.xlane.xlu0 %308
          %v310 = vsel %vm294, %v283, 0.0
          %311 = vadd.xlane.f32.xlu0 %v310
          %v312 = vpop.xlane.xlu0 %311
          %v313 = vsel %vm294, %v284, 0.0
          %314 = vadd.xlane.f32.xlu0 %v313
          %v315 = vpop.xlane.xlu0 %314
          %v316 = vsel %vm294, %v285, 0.0
          %317 = vadd.xlane.f32.xlu0 %v316
          %v318 = vpop.xlane.xlu0 %317
          %v319 = vsel %vm294, %v286, 0.0
          %320 = vadd.xlane.f32.xlu0 %v319
          %v321 = vpop.xlane.xlu0 %320
          %v322 = vsel %vm294, %v287, 0.0
          %323 = vadd.xlane.f32.xlu0 %v322
          %v324 = vpop.xlane.xlu0 %323
          %v325 = vsel %vm294, %v288, 0.0
          %326 = vadd.xlane.f32.xlu0 %v325
          %v327 = vpop.xlane.xlu0 %326
          %v328 = vsel %vm294, %v289, 0.0
          %329 = vadd.xlane.f32.xlu0 %v328
          %v330 = vpop.xlane.xlu0 %329
          %v331 = vsel %vm294, %v290, 0.0
          %332 = vadd.xlane.f32.xlu0 %v331
          %v333 = vpop.xlane.xlu0 %332
          %v334 = vsel %vm294, %v291, 0.0
          %335 = vadd.xlane.f32.xlu0 %v334
          %v336 = vpop.xlane.xlu0 %335
          %v337 = vsel %vm294, %v292, 0.0
          %338 = vadd.xlane.f32.xlu0 %v337
          %v339 = vpop.xlane.xlu0 %338
          %v340 = vsel %vm294, %v293, 0.0
          %341 = vadd.xlane.f32.xlu0 %v340
          %v342 = vpop.xlane.xlu0 %341
          %v343 = vrsqrt.pop %v297
          %v344 = vmul.f32 %v297, %v343
          %vm345 = vcmp.eq.f32.partialorder %v297, inf
          %v346 = vsel %vm345, %v297, %v344
          %vm347 = vcmp.eq.f32.partialorder %v297, 0.0
          %v348 = vand.u32 %v297, 2147483648
          %v349 = vsel %vm347, %v348, %v346
          %v350 = vrsqrt.pop %v300
          %v351 = vmul.f32 %v300, %v350
          %vm352 = vcmp.eq.f32.partialorder %v300, inf
          %v353 = vsel %vm352, %v300, %v351
          %vm354 = vcmp.eq.f32.partialorder %v300, 0.0
          %v355 = vand.u32 %v300, 2147483648
          %v356 = vsel %vm354, %v355, %v353
          %v357 = vrsqrt.pop %v303
          %v358 = vmul.f32 %v303, %v357
          %vm359 = vcmp.eq.f32.partialorder %v303, inf
          %v360 = vsel %vm359, %v303, %v358
          %vm361 = vcmp.eq.f32.partialorder %v303, 0.0
          %v362 = vand.u32 %v303, 2147483648
          %v363 = vsel %vm361, %v362, %v360
          %v364 = vrsqrt.pop %v306
          %v365 = vmul.f32 %v306, %v364
          %vm366 = vcmp.eq.f32.partialorder %v306, inf
          %v367 = vsel %vm366, %v306, %v365
          %vm368 = vcmp.eq.f32.partialorder %v306, 0.0
          %v369 = vand.u32 %v306, 2147483648
          %v370 = vsel %vm368, %v369, %v367
          %v371 = vrsqrt.pop %v309
          %v372 = vmul.f32 %v309, %v371
          %vm373 = vcmp.eq.f32.partialorder %v309, inf
          %v374 = vsel %vm373, %v309, %v372
          %vm375 = vcmp.eq.f32.partialorder %v309, 0.0
          %v376 = vand.u32 %v309, 2147483648
          %v377 = vsel %vm375, %v376, %v374
          %v378 = vrsqrt.pop %v312
          %v379 = vmul.f32 %v312, %v378
          %vm380 = vcmp.eq.f32.partialorder %v312, inf
          %v381 = vsel %vm380, %v312, %v379
          %vm382 = vcmp.eq.f32.partialorder %v312, 0.0
          %v383 = vand.u32 %v312, 2147483648
          %v384 = vsel %vm382, %v383, %v381
          %v385 = vrsqrt.pop %v315
          %v386 = vmul.f32 %v315, %v385
          %vm387 = vcmp.eq.f32.partialorder %v315, inf
          %v388 = vsel %vm387, %v315, %v386
          %vm389 = vcmp.eq.f32.partialorder %v315, 0.0
          %v390 = vand.u32 %v315, 2147483648
          %v391 = vsel %vm389, %v390, %v388
          %v392 = vrsqrt.pop %v318
          %v393 = vmul.f32 %v318, %v392
          %vm394 = vcmp.eq.f32.partialorder %v318, inf
          %v395 = vsel %vm394, %v318, %v393
          %vm396 = vcmp.eq.f32.partialorder %v318, 0.0
          %v397 = vand.u32 %v318, 2147483648
          %v398 = vsel %vm396, %v397, %v395
          %v399 = vrsqrt.pop %v321
          %v400 = vmul.f32 %v321, %v399
          %vm401 = vcmp.eq.f32.partialorder %v321, inf
          %v402 = vsel %vm401, %v321, %v400
          %vm403 = vcmp.eq.f32.partialorder %v321, 0.0
          %v404 = vand.u32 %v321, 2147483648
          %v405 = vsel %vm403, %v404, %v402
          %v406 = vrsqrt.pop %v324
          %v407 = vmul.f32 %v324, %v406
          %vm408 = vcmp.eq.f32.partialorder %v324, inf
          %v409 = vsel %vm408, %v324, %v407
          %vm410 = vcmp.eq.f32.partialorder %v324, 0.0
          %v411 = vand.u32 %v324, 2147483648
          %v412 = vsel %vm410, %v411, %v409
          %v413 = vrsqrt.pop %v327
          %v414 = vmul.f32 %v327, %v413
          %vm415 = vcmp.eq.f32.partialorder %v327, inf
          %v416 = vsel %vm415, %v327, %v414
          %vm417 = vcmp.eq.f32.partialorder %v327, 0.0
          %v418 = vand.u32 %v327, 2147483648
          %v419 = vsel %vm417, %v418, %v416
          %v420 = vrsqrt.pop %v330
          %v421 = vmul.f32 %v330, %v420
          %vm422 = vcmp.eq.f32.partialorder %v330, inf
          %v423 = vsel %vm422, %v330, %v421
          %vm424 = vcmp.eq.f32.partialorder %v330, 0.0
          %v425 = vand.u32 %v330, 2147483648
          %v426 = vsel %vm424, %v425, %v423
          %v427 = vrsqrt.pop %v333
          %v428 = vmul.f32 %v333, %v427
          %vm429 = vcmp.eq.f32.partialorder %v333, inf
          %v430 = vsel %vm429, %v333, %v428
          %vm431 = vcmp.eq.f32.partialorder %v333, 0.0
          %v432 = vand.u32 %v333, 2147483648
          %v433 = vsel %vm431, %v432, %v430
          %v434 = vrsqrt.pop %v336
          %v435 = vmul.f32 %v336, %v434
          %vm436 = vcmp.eq.f32.partialorder %v336, inf
          %v437 = vsel %vm436, %v336, %v435
          %vm438 = vcmp.eq.f32.partialorder %v336, 0.0
          %v439 = vand.u32 %v336, 2147483648
          %v440 = vsel %vm438, %v439, %v437
          %v441 = vrsqrt.pop %v339
          %v442 = vmul.f32 %v339, %v441
          %vm443 = vcmp.eq.f32.partialorder %v339, inf
          %v444 = vsel %vm443, %v339, %v442
          %vm445 = vcmp.eq.f32.partialorder %v339, 0.0
          %v446 = vand.u32 %v339, 2147483648
          %v447 = vsel %vm445, %v446, %v444
          %v448 = vrsqrt.pop %v342
          %v449 = vmul.f32 %v342, %v448
          %vm450 = vcmp.eq.f32.partialorder %v342, inf
          %v451 = vsel %vm450, %v342, %v449
          %vm452 = vcmp.eq.f32.partialorder %v342, 0.0
          %v453 = vand.u32 %v342, 2147483648
          %v454 = vsel %vm452, %v453, %v451
          %v455 = vmax.f32 %v349, 1e-12
          %v456 = vmax.f32 %v356, 1e-12
          %v457 = vmax.f32 %v363, 1e-12
          %v458 = vmax.f32 %v370, 1e-12
          %v459 = vmax.f32 %v377, 1e-12
          %v460 = vmax.f32 %v384, 1e-12
          %v461 = vmax.f32 %v391, 1e-12
          %v462 = vmax.f32 %v398, 1e-12
          %v463 = vmax.f32 %v405, 1e-12
          %v464 = vmax.f32 %v412, 1e-12
          %v465 = vmax.f32 %v419, 1e-12
          %v466 = vmax.f32 %v426, 1e-12
          %v467 = vmax.f32 %v433, 1e-12
          %v468 = vmax.f32 %v440, 1e-12
          %v469 = vmax.f32 %v447, 1e-12
          %v470 = vmax.f32 %v454, 1e-12
          %v471 = vrcp.pop %v455
          %v472 = vmul.f32 1.0, %v471
          %v473 = vrcp.pop %v456
          %v474 = vmul.f32 1.0, %v473
          %v475 = vrcp.pop %v457
          %v476 = vmul.f32 1.0, %v475
          %v477 = vrcp.pop %v458
          %v478 = vmul.f32 1.0, %v477
          %v479 = vrcp.pop %v459
          %v480 = vmul.f32 1.0, %v479
          %v481 = vrcp.pop %v460
          %v482 = vmul.f32 1.0, %v481
          %v483 = vrcp.pop %v461
          %v484 = vmul.f32 1.0, %v483
          %v485 = vrcp.pop %v462
          %v486 = vmul.f32 1.0, %v485
          %v487 = vrcp.pop %v463
          %v488 = vmul.f32 1.0, %v487
          %v489 = vrcp.pop %v464
          %v490 = vmul.f32 1.0, %v489
          %v491 = vrcp.pop %v465
          %v492 = vmul.f32 1.0, %v491
          %v493 = vrcp.pop %v466
          %v494 = vmul.f32 1.0, %v493
          %v495 = vrcp.pop %v467
          %v496 = vmul.f32 1.0, %v495
          %v497 = vrcp.pop %v468
          %v498 = vmul.f32 1.0, %v497
          %v499 = vrcp.pop %v469
          %v500 = vmul.f32 1.0, %v499
          %v501 = vrcp.pop %v470
          %v502 = vmul.f32 1.0, %v501
          %vm503 = vcmask 7168
          %504 = vst.msk [vmem:[#allocation2] sm:$0xff] %vm503, %v472
          %505 = vst.msk [vmem:[#allocation2 + $0x8] sm:$0xff] %vm503, %v474
          %506 = vst.msk [vmem:[#allocation2 + $0x10] sm:$0xff] %vm503, %v476
          %507 = vst.msk [vmem:[#allocation2 + $0x18] sm:$0xff] %vm503, %v478
          %508 = vst.msk [vmem:[#allocation2 + $0x20] sm:$0xff] %vm503, %v480
          %509 = vst.msk [vmem:[#allocation2 + $0x28] sm:$0xff] %vm503, %v482
          %510 = vst.msk [vmem:[#allocation2 + $0x30] sm:$0xff] %vm503, %v484
          %511 = vst.msk [vmem:[#allocation2 + $0x38] sm:$0xff] %vm503, %v486
          %512 = vst.msk [vmem:[#allocation2 + $0x40] sm:$0xff] %vm503, %v488
          %513 = vst.msk [vmem:[#allocation2 + $0x48] sm:$0xff] %vm503, %v490
          %514 = vst.msk [vmem:[#allocation2 + $0x50] sm:$0xff] %vm503, %v492
          %515 = vst.msk [vmem:[#allocation2 + $0x58] sm:$0xff] %vm503, %v494
          %516 = vst.msk [vmem:[#allocation2 + $0x60] sm:$0xff] %vm503, %v496
          %517 = vst.msk [vmem:[#allocation2 + $0x68] sm:$0xff] %vm503, %v498
          %518 = vst.msk [vmem:[#allocation2 + $0x70] sm:$0xff] %vm503, %v500
          %519 = vst.msk [vmem:[#allocation2 + $0x78] sm:$0xff] %vm503, %v502
        $region74: #{tpu_custom_call.1} parent=65 // pred_fallthru
          _
        %v520 = vld [vmem:[%s252] sm:$0xff]
        %v521 = vld [vmem:[%s252 + $0x8] sm:$0xff]
        %v522 = vld [vmem:[%s252 + $0x10] sm:$0xff]
        %v523 = vld [vmem:[%s252 + $0x18] sm:$0xff]
        %v524 = vld [vmem:[%s252 + $0x20] sm:$0xff]
        %v525 = vld [vmem:[%s252 + $0x28] sm:$0xff]
        %v526 = vld [vmem:[%s252 + $0x30] sm:$0xff]
        %v527 = vld [vmem:[%s252 + $0x38] sm:$0xff]
        %v528 = vld [vmem:[%s252 + $0x40] sm:$0xff]
        %v529 = vld [vmem:[%s252 + $0x48] sm:$0xff]
        %v530 = vld [vmem:[%s252 + $0x50] sm:$0xff]
        %v531 = vld [vmem:[%s252 + $0x58] sm:$0xff]
        %v532 = vld [vmem:[%s252 + $0x60] sm:$0xff]
        %v533 = vld [vmem:[%s252 + $0x68] sm:$0xff]
        %v534 = vld [vmem:[%s252 + $0x70] sm:$0xff]
        %v535 = vld [vmem:[%s252 + $0x78] sm:$0xff]
        %v536 = vld [vmem:[%s224] sm:$0xff]
        %v537 = vld [vmem:[%s224 + $0x8] sm:$0xff]
        %v538 = vld [vmem:[%s224 + $0x10] sm:$0xff]
        %v539 = vld [vmem:[%s224 + $0x18] sm:$0xff]
        %vm540 = vcmask 261120
        %v542 = vsel %vm540, %v520, 0
        %v545 = vsel %vm540, %v521, 0
        %v548 = vsel %vm540, %v522, 0
        %v551 = vsel %vm540, %v523, 0
        %v554 = vsel %vm540, %v524, 0
        %v557 = vsel %vm540, %v525, 0
        %v560 = vsel %vm540, %v526, 0
        %v563 = vsel %vm540, %v527, 0
        %v566 = vsel %vm540, %v528, 0
        %v569 = vsel %vm540, %v529, 0
        %v572 = vsel %vm540, %v530, 0
        %v575 = vsel %vm540, %v531, 0
        %v578 = vsel %vm540, %v532, 0
        %v581 = vsel %vm540, %v533, 0
        %v584 = vsel %vm540, %v534, 0
        %v587 = vsel %vm540, %v535, 0
        %589 = vmatprep.subr.mxu0 0.0
        %590 = vmatpush1.msra.mxu0 0.0
        %591 = vmatprep.subr.mxu0 0.0
        %592 = vmatpush1.msra.mxu0 0.0
        %593 = vmatprep.subr.mxu0 0.0
        %594 = vmatpush1.msra.mxu0 0.0
        %595 = vmatprep.subr.mxu0 0.0
        %596 = vmatpush1.msra.mxu0 0.0
        %597 = vmatprep.subr.mxu0 0.0
        %598 = vmatpush1.msra.mxu0 0.0
        %599 = vmatprep.subr.mxu0 0.0
        %600 = vmatpush1.msra.mxu0 0.0
        %601 = vmatprep.subr.mxu0 0.0
        %602 = vmatpush1.msra.mxu0 0.0
        %603 = vmatprep.subr.mxu0 0.0
        %604 = vmatpush1.msra.mxu0 0.0
        %605 = vmatprep.subr.mxu0 0.0
        %606 = vmatpush1.msra.mxu0 0.0
        %607 = vmatprep.subr.mxu0 0.0
        %608 = vmatpush1.msra.mxu0 0.0
        %609 = vmatprep.subr.mxu0 0.0
        %610 = vmatpush1.msra.mxu0 0.0
        %611 = vmatprep.subr.mxu0 0.0
        %612 = vmatpush1.msra.mxu0 0.0
        %613 = vmatprep.subr.mxu0 0.0
        %614 = vmatpush1.msra.mxu0 %v539
        %615 = vmatprep.subr.mxu0 0.0
        %616 = vmatpush1.msra.mxu0 %v538
        %617 = vmatprep.subr.mxu0 0.0
        %618 = vmatpush1.msra.mxu0 %v537
        %619 = vmatprep.subr.mxu0 0.0
        %620 = vmatpush1.msra.mxu0 %v536
        %621 = vmatprep.subr.mxu0 0.0
        %622 = vmatpush2.msra.mxu0 0.0
        %623 = vmatprep.subr.mxu0 0.0
        %624 = vmatpush2.msra.mxu0 0.0
        %625 = vmatprep.subr.mxu0 0.0
        %626 = vmatpush2.msra.mxu0 0.0
        %627 = vmatprep.subr.mxu0 0.0
        %628 = vmatpush2.msra.mxu0 0.0
        %629 = vmatprep.subr.mxu0 0.0
        %630 = vmatpush2.msra.mxu0 0.0
        %631 = vmatprep.subr.mxu0 0.0
        %632 = vmatpush2.msra.mxu0 0.0
        %633 = vmatprep.subr.mxu0 0.0
        %634 = vmatpush2.msra.mxu0 0.0
        %635 = vmatprep.subr.mxu0 0.0
        %636 = vmatpush2.msra.mxu0 0.0
        %637 = vmatprep.subr.mxu0 0.0
        %638 = vmatpush2.msra.mxu0 0.0
        %639 = vmatprep.subr.mxu0 0.0
        %640 = vmatpush2.msra.mxu0 0.0
        %641 = vmatprep.subr.mxu0 0.0
        %642 = vmatpush2.msra.mxu0 0.0
        %643 = vmatprep.subr.mxu0 0.0
        %644 = vmatpush2.msra.mxu0 0.0
        %645 = vmatprep.subr.mxu0 0.0
        %646 = vmatpush2.msra.mxu0 0.0
        %647 = vmatprep.subr.mxu0 0.0
        %648 = vmatpush2.msra.mxu0 0.0
        %649 = vmatprep.subr.mxu0 0.0
        %650 = vmatpush2.msra.mxu0 0.0
        %651 = vmatprep.subr.mxu0 0.0
        %652 = vmatpush2.msra.mxu0 0.0
        %653 = vmatprep.mubr.f32.mxu0 0.0
        %654 = vmatmul.mubr.f32.gmra.mxu0 %v542
        %v655 = vpop.f32.mrf.mxu0
        %v656 = vadd.f32 0.0, %v655
        %v657 = vpop.f32.mrf.mxu0
        %658 = vmatprep.mubr.f32.mxu0 0.0
        %659 = vmatmul.mubr.f32.gmra.mxu0 %v545
        %v660 = vpop.f32.mrf.mxu0
        %v661 = vadd.f32 0.0, %v660
        %v662 = vpop.f32.mrf.mxu0
        %663 = vmatprep.mubr.f32.mxu0 0.0
        %664 = vmatmul.mubr.f32.gmra.mxu0 %v548
        %v665 = vpop.f32.mrf.mxu0
        %v666 = vadd.f32 0.0, %v665
        %v667 = vpop.f32.mrf.mxu0
        %668 = vmatprep.mubr.f32.mxu0 0.0
        %669 = vmatmul.mubr.f32.gmra.mxu0 %v551
        %v670 = vpop.f32.mrf.mxu0
        %v671 = vadd.f32 0.0, %v670
        %v672 = vpop.f32.mrf.mxu0
        %673 = vmatprep.mubr.f32.mxu0 0.0
        %674 = vmatmul.mubr.f32.gmra.mxu0 %v554
        %v675 = vpop.f32.mrf.mxu0
        %v676 = vadd.f32 0.0, %v675
        %v677 = vpop.f32.mrf.mxu0
        %678 = vmatprep.mubr.f32.mxu0 0.0
        %679 = vmatmul.mubr.f32.gmra.mxu0 %v557
        %v680 = vpop.f32.mrf.mxu0
        %v681 = vadd.f32 0.0, %v680
        %v682 = vpop.f32.mrf.mxu0
        %683 = vmatprep.mubr.f32.mxu0 0.0
        %684 = vmatmul.mubr.f32.gmra.mxu0 %v560
        %v685 = vpop.f32.mrf.mxu0
        %v686 = vadd.f32 0.0, %v685
        %v687 = vpop.f32.mrf.mxu0
        %688 = vmatprep.mubr.f32.mxu0 0.0
        %689 = vmatmul.mubr.f32.gmra.mxu0 %v563
        %v690 = vpop.f32.mrf.mxu0
        %v691 = vadd.f32 0.0, %v690
        %v692 = vpop.f32.mrf.mxu0
        %693 = vmatprep.mubr.f32.mxu0 0.0
        %694 = vmatmul.mubr.f32.gmra.mxu0 %v566
        %v695 = vpop.f32.mrf.mxu0
        %v696 = vadd.f32 0.0, %v695
        %v697 = vpop.f32.mrf.mxu0
        %698 = vmatprep.mubr.f32.mxu0 0.0
        %699 = vmatmul.mubr.f32.gmra.mxu0 %v569
        %v700 = vpop.f32.mrf.mxu0
        %v701 = vadd.f32 0.0, %v700
        %v702 = vpop.f32.mrf.mxu0
        %703 = vmatprep.mubr.f32.mxu0 0.0
        %704 = vmatmul.mubr.f32.gmra.mxu0 %v572
        %v705 = vpop.f32.mrf.mxu0
        %v706 = vadd.f32 0.0, %v705
        %v707 = vpop.f32.mrf.mxu0
        %708 = vmatprep.mubr.f32.mxu0 0.0
        %709 = vmatmul.mubr.f32.gmra.mxu0 %v575
        %v710 = vpop.f32.mrf.mxu0
        %v711 = vadd.f32 0.0, %v710
        %v712 = vpop.f32.mrf.mxu0
        %713 = vmatprep.mubr.f32.mxu0 0.0
        %714 = vmatmul.mubr.f32.gmra.mxu0 %v578
        %v715 = vpop.f32.mrf.mxu0
        %v716 = vadd.f32 0.0, %v715
        %v717 = vpop.f32.mrf.mxu0
        %718 = vmatprep.mubr.f32.mxu0 0.0
        %719 = vmatmul.mubr.f32.gmra.mxu0 %v581
        %v720 = vpop.f32.mrf.mxu0
        %v721 = vadd.f32 0.0, %v720
        %v722 = vpop.f32.mrf.mxu0
        %723 = vmatprep.mubr.f32.mxu0 0.0
        %724 = vmatmul.mubr.f32.gmra.mxu0 %v584
        %v725 = vpop.f32.mrf.mxu0
        %v726 = vadd.f32 0.0, %v725
        %v727 = vpop.f32.mrf.mxu0
        %728 = vmatprep.mubr.f32.mxu0 0.0
        %729 = vmatmul.mubr.f32.gmra.mxu0 %v587
        %v730 = vpop.f32.mrf.mxu0
        %v731 = vadd.f32 0.0, %v730
        %v732 = vpop.f32.mrf.mxu0
        %733 = vdwg.mxu0
        %v734 = vld [vmem:[#allocation2] sm:$0xff]
        %v735 = vld [vmem:[#allocation2 + $0x8] sm:$0xff]
        %v736 = vld [vmem:[#allocation2 + $0x10] sm:$0xff]
        %v737 = vld [vmem:[#allocation2 + $0x18] sm:$0xff]
        %v738 = vld [vmem:[#allocation2 + $0x20] sm:$0xff]
        %v739 = vld [vmem:[#allocation2 + $0x28] sm:$0xff]
        %v740 = vld [vmem:[#allocation2 + $0x30] sm:$0xff]
        %v741 = vld [vmem:[#allocation2 + $0x38] sm:$0xff]
        %v742 = vld [vmem:[#allocation2 + $0x40] sm:$0xff]
        %v743 = vld [vmem:[#allocation2 + $0x48] sm:$0xff]
        %v744 = vld [vmem:[#allocation2 + $0x50] sm:$0xff]
        %v745 = vld [vmem:[#allocation2 + $0x58] sm:$0xff]
        %v746 = vld [vmem:[#allocation2 + $0x60] sm:$0xff]
        %v747 = vld [vmem:[#allocation2 + $0x68] sm:$0xff]
        %v748 = vld [vmem:[#allocation2 + $0x70] sm:$0xff]
        %v749 = vld [vmem:[#allocation2 + $0x78] sm:$0xff]
        %v750 = vld [vmem:[%s256] sm:$0x1]
        %752 = vset.pattern.permute.xlu0 0
        %753 = vperm.xlu0 %752, %v734
        %v754 = vpop.permute.xlu0 %753
        %757 = vset.pattern.permute.xlu0 0
        %758 = vperm.xlu0 %757, %v735
        %v759 = vpop.permute.xlu0 %758
        %762 = vset.pattern.permute.xlu0 0
        %763 = vperm.xlu0 %762, %v736
        %v764 = vpop.permute.xlu0 %763
        %767 = vset.pattern.permute.xlu0 0
        %768 = vperm.xlu0 %767, %v737
        %v769 = vpop.permute.xlu0 %768
        %772 = vset.pattern.permute.xlu0 0
        %773 = vperm.xlu0 %772, %v738
        %v774 = vpop.permute.xlu0 %773
        %777 = vset.pattern.permute.xlu0 0
        %778 = vperm.xlu0 %777, %v739
        %v779 = vpop.permute.xlu0 %778
        %782 = vset.pattern.permute.xlu0 0
        %783 = vperm.xlu0 %782, %v740
        %v784 = vpop.permute.xlu0 %783
        %787 = vset.pattern.permute.xlu0 0
        %788 = vperm.xlu0 %787, %v741
        %v789 = vpop.permute.xlu0 %788
        %792 = vset.pattern.permute.xlu0 0
        %793 = vperm.xlu0 %792, %v742
        %v794 = vpop.permute.xlu0 %793
        %797 = vset.pattern.permute.xlu0 0
        %798 = vperm.xlu0 %797, %v743
        %v799 = vpop.permute.xlu0 %798
        %802 = vset.pattern.permute.xlu0 0
        %803 = vperm.xlu0 %802, %v744
        %v804 = vpop.permute.xlu0 %803
        %807 = vset.pattern.permute.xlu0 0
        %808 = vperm.xlu0 %807, %v745
        %v809 = vpop.permute.xlu0 %808
        %812 = vset.pattern.permute.xlu0 0
        %813 = vperm.xlu0 %812, %v746
        %v814 = vpop.permute.xlu0 %813
        %817 = vset.pattern.permute.xlu0 0
        %818 = vperm.xlu0 %817, %v747
        %v819 = vpop.permute.xlu0 %818
        %822 = vset.pattern.permute.xlu0 0
        %823 = vperm.xlu0 %822, %v748
        %v824 = vpop.permute.xlu0 %823
        %827 = vset.pattern.permute.xlu0 0
        %828 = vperm.xlu0 %827, %v749
        %v829 = vpop.permute.xlu0 %828
        %v832 = vlaneseq
        %v833 = vshrl.u32 %v832, 7
        %v834 = vsub.s32 0, %v833
        %v835 = vrot.slane %v750, %v834
        %v837 = vmul.f32 %v754, %v835
        %v838 = vmul.f32 %v759, %v835
        %v839 = vmul.f32 %v764, %v835
        %v840 = vmul.f32 %v769, %v835
        %v841 = vmul.f32 %v774, %v835
        %v842 = vmul.f32 %v779, %v835
        %v843 = vmul.f32 %v784, %v835
        %v844 = vmul.f32 %v789, %v835
        %v845 = vmul.f32 %v794, %v835
        %v846 = vmul.f32 %v799, %v835
        %v847 = vmul.f32 %v804, %v835
        %v848 = vmul.f32 %v809, %v835
        %v849 = vmul.f32 %v814, %v835
        %v850 = vmul.f32 %v819, %v835
        %v851 = vmul.f32 %v824, %v835
        %v852 = vmul.f32 %v829, %v835
        %v853 = vmul.f32 %v656, %v837
        %v854 = vmul.f32 %v661, %v838
        %v855 = vmul.f32 %v666, %v839
        %v856 = vmul.f32 %v671, %v840
        %v857 = vmul.f32 %v676, %v841
        %v858 = vmul.f32 %v681, %v842
        %v859 = vmul.f32 %v686, %v843
        %v860 = vmul.f32 %v691, %v844
        %v861 = vmul.f32 %v696, %v845
        %v862 = vmul.f32 %v701, %v846
        %v863 = vmul.f32 %v706, %v847
        %v864 = vmul.f32 %v711, %v848
        %v865 = vmul.f32 %v716, %v849
        %v866 = vmul.f32 %v721, %v850
        %v867 = vmul.f32 %v726, %v851
        %v868 = vmul.f32 %v731, %v852
        %s869 = smul.u32 %s20, 128
        %s870 = scalar_lea.vmem [#allocation3], %s869
        %871 = vst [vmem:[%s870] sm:$0xff] %v853
        %872 = vst [vmem:[%s870 + $0x8] sm:$0xff] %v854
        %873 = vst [vmem:[%s870 + $0x10] sm:$0xff] %v855
        %874 = vst [vmem:[%s870 + $0x18] sm:$0xff] %v856
        %875 = vst [vmem:[%s870 + $0x20] sm:$0xff] %v857
        %876 = vst [vmem:[%s870 + $0x28] sm:$0xff] %v858
        %877 = vst [vmem:[%s870 + $0x30] sm:$0xff] %v859
        %878 = vst [vmem:[%s870 + $0x38] sm:$0xff] %v860
        %879 = vst [vmem:[%s870 + $0x40] sm:$0xff] %v861
        %880 = vst [vmem:[%s870 + $0x48] sm:$0xff] %v862
        %881 = vst [vmem:[%s870 + $0x50] sm:$0xff] %v863
        %882 = vst [vmem:[%s870 + $0x58] sm:$0xff] %v864
        %883 = vst [vmem:[%s870 + $0x60] sm:$0xff] %v865
        %884 = vst [vmem:[%s870 + $0x68] sm:$0xff] %v866
        %885 = vst [vmem:[%s870 + $0x70] sm:$0xff] %v867
        %886 = vst [vmem:[%s870 + $0x78] sm:$0xff] %v868
        %p887 = scmp.eq.s32.totalorder %s20, 2
        // Predicated region
        $region75: #{tpu_custom_call.1} parent=65 // pred_check
          %p888 = pneg %p887
        $region76: #{tpu_custom_call.1} parent=65 // pred_check_branch
          %890 = sbr.rel (%p888) target = $region78
        $region77: #{tpu_custom_call.1} parent=65 // pred_region
          %v891 = vld [vmem:[#allocation3] sm:$0xff]
          %v892 = vld [vmem:[#allocation3 + $0x8] sm:$0xff]
          %v893 = vld [vmem:[#allocation3 + $0x10] sm:$0xff]
          %v894 = vld [vmem:[#allocation3 + $0x18] sm:$0xff]
          %v895 = vld [vmem:[#allocation3 + $0x20] sm:$0xff]
          %v896 = vld [vmem:[#allocation3 + $0x28] sm:$0xff]
          %v897 = vld [vmem:[#allocation3 + $0x30] sm:$0xff]
          %v898 = vld [vmem:[#allocation3 + $0x38] sm:$0xff]
          %v899 = vld [vmem:[#allocation3 + $0x40] sm:$0xff]
          %v900 = vld [vmem:[#allocation3 + $0x48] sm:$0xff]
          %v901 = vld [vmem:[#allocation3 + $0x50] sm:$0xff]
          %v902 = vld [vmem:[#allocation3 + $0x58] sm:$0xff]
          %v903 = vld [vmem:[#allocation3 + $0x60] sm:$0xff]
          %v904 = vld [vmem:[#allocation3 + $0x68] sm:$0xff]
          %v905 = vld [vmem:[#allocation3 + $0x70] sm:$0xff]
          %v906 = vld [vmem:[#allocation3 + $0x78] sm:$0xff]
          %v907 = vmul.f32 %v891, 10.0
          %v908 = vmul.f32 %v892, 10.0
          %v909 = vmul.f32 %v893, 10.0
          %v910 = vmul.f32 %v894, 10.0
          %v911 = vmul.f32 %v895, 10.0
          %v912 = vmul.f32 %v896, 10.0
          %v913 = vmul.f32 %v897, 10.0
          %v914 = vmul.f32 %v898, 10.0
          %v915 = vmul.f32 %v899, 10.0
          %v916 = vmul.f32 %v900, 10.0
          %v917 = vmul.f32 %v901, 10.0
          %v918 = vmul.f32 %v902, 10.0
          %v919 = vmul.f32 %v903, 10.0
          %v920 = vmul.f32 %v904, 10.0
          %v921 = vmul.f32 %v905, 10.0
          %v922 = vmul.f32 %v906, 10.0
          %v923 = vmul.f32 %v907, 1.442695
          %v924 = vpow.pop %v923
          %v925 = vmul.f32 %v908, 1.442695
          %v926 = vpow.pop %v925
          %v927 = vmul.f32 %v909, 1.442695
          %v928 = vpow.pop %v927
          %v929 = vmul.f32 %v910, 1.442695
          %v930 = vpow.pop %v929
          %v931 = vmul.f32 %v911, 1.442695
          %v932 = vpow.pop %v931
          %v933 = vmul.f32 %v912, 1.442695
          %v934 = vpow.pop %v933
          %v935 = vmul.f32 %v913, 1.442695
          %v936 = vpow.pop %v935
          %v937 = vmul.f32 %v914, 1.442695
          %v938 = vpow.pop %v937
          %v939 = vmul.f32 %v915, 1.442695
          %v940 = vpow.pop %v939
          %v941 = vmul.f32 %v916, 1.442695
          %v942 = vpow.pop %v941
          %v943 = vmul.f32 %v917, 1.442695
          %v944 = vpow.pop %v943
          %v945 = vmul.f32 %v918, 1.442695
          %v946 = vpow.pop %v945
          %v947 = vmul.f32 %v919, 1.442695
          %v948 = vpow.pop %v947
          %v949 = vmul.f32 %v920, 1.442695
          %v950 = vpow.pop %v949
          %v951 = vmul.f32 %v921, 1.442695
          %v952 = vpow.pop %v951
          %v953 = vmul.f32 %v922, 1.442695
          %v954 = vpow.pop %v953
          %v955 = vmul.f32 %v891, %v891
          %v956 = vmul.f32 %v892, %v892
          %v957 = vmul.f32 %v893, %v893
          %v958 = vmul.f32 %v894, %v894
          %v959 = vmul.f32 %v895, %v895
          %v960 = vmul.f32 %v896, %v896
          %v961 = vmul.f32 %v897, %v897
          %v962 = vmul.f32 %v898, %v898
          %v963 = vmul.f32 %v899, %v899
          %v964 = vmul.f32 %v900, %v900
          %v965 = vmul.f32 %v901, %v901
          %v966 = vmul.f32 %v902, %v902
          %v967 = vmul.f32 %v903, %v903
          %v968 = vmul.f32 %v904, %v904
          %v969 = vmul.f32 %v905, %v905
          %v970 = vmul.f32 %v906, %v906
          %v971 = vsub.f32 1.0, %v955
          %v972 = vsub.f32 1.0, %v956
          %v973 = vsub.f32 1.0, %v957
          %v974 = vsub.f32 1.0, %v958
          %v975 = vsub.f32 1.0, %v959
          %v976 = vsub.f32 1.0, %v960
          %v977 = vsub.f32 1.0, %v961
          %v978 = vsub.f32 1.0, %v962
          %v979 = vsub.f32 1.0, %v963
          %v980 = vsub.f32 1.0, %v964
          %v981 = vsub.f32 1.0, %v965
          %v982 = vsub.f32 1.0, %v966
          %v983 = vsub.f32 1.0, %v967
          %v984 = vsub.f32 1.0, %v968
          %v985 = vsub.f32 1.0, %v969
          %v986 = vsub.f32 1.0, %v970
          %v987 = vmax.f32 %v971, 0.0
          %v988 = vmax.f32 %v972, 0.0
          %v989 = vmax.f32 %v973, 0.0
          %v990 = vmax.f32 %v974, 0.0
          %v991 = vmax.f32 %v975, 0.0
          %v992 = vmax.f32 %v976, 0.0
          %v993 = vmax.f32 %v977, 0.0
          %v994 = vmax.f32 %v978, 0.0
          %v995 = vmax.f32 %v979, 0.0
          %v996 = vmax.f32 %v980, 0.0
          %v997 = vmax.f32 %v981, 0.0
          %v998 = vmax.f32 %v982, 0.0
          %v999 = vmax.f32 %v983, 0.0
          %v1000 = vmax.f32 %v984, 0.0
          %v1001 = vmax.f32 %v985, 0.0
          %v1002 = vmax.f32 %v986, 0.0
          %v1003 = vrsqrt.pop %v987
          %v1004 = vmul.f32 %v987, %v1003
          %vm1005 = vcmp.eq.f32.partialorder %v987, inf
          %v1006 = vsel %vm1005, %v987, %v1004
          %vm1007 = vcmp.eq.f32.partialorder %v987, 0.0
          %v1008 = vand.u32 %v987, 2147483648
          %v1009 = vsel %vm1007, %v1008, %v1006
          %v1010 = vrsqrt.pop %v988
          %v1011 = vmul.f32 %v988, %v1010
          %vm1012 = vcmp.eq.f32.partialorder %v988, inf
          %v1013 = vsel %vm1012, %v988, %v1011
          %vm1014 = vcmp.eq.f32.partialorder %v988, 0.0
          %v1015 = vand.u32 %v988, 2147483648
          %v1016 = vsel %vm1014, %v1015, %v1013
          %v1017 = vrsqrt.pop %v989
          %v1018 = vmul.f32 %v989, %v1017
          %vm1019 = vcmp.eq.f32.partialorder %v989, inf
          %v1020 = vsel %vm1019, %v989, %v1018
          %vm1021 = vcmp.eq.f32.partialorder %v989, 0.0
          %v1022 = vand.u32 %v989, 2147483648
          %v1023 = vsel %vm1021, %v1022, %v1020
          %v1024 = vrsqrt.pop %v990
          %v1025 = vmul.f32 %v990, %v1024
          %vm1026 = vcmp.eq.f32.partialorder %v990, inf
          %v1027 = vsel %vm1026, %v990, %v1025
          %vm1028 = vcmp.eq.f32.partialorder %v990, 0.0
          %v1029 = vand.u32 %v990, 2147483648
          %v1030 = vsel %vm1028, %v1029, %v1027
          %v1031 = vrsqrt.pop %v991
          %v1032 = vmul.f32 %v991, %v1031
          %vm1033 = vcmp.eq.f32.partialorder %v991, inf
          %v1034 = vsel %vm1033, %v991, %v1032
          %vm1035 = vcmp.eq.f32.partialorder %v991, 0.0
          %v1036 = vand.u32 %v991, 2147483648
          %v1037 = vsel %vm1035, %v1036, %v1034
          %v1038 = vrsqrt.pop %v992
          %v1039 = vmul.f32 %v992, %v1038
          %vm1040 = vcmp.eq.f32.partialorder %v992, inf
          %v1041 = vsel %vm1040, %v992, %v1039
          %vm1042 = vcmp.eq.f32.partialorder %v992, 0.0
          %v1043 = vand.u32 %v992, 2147483648
          %v1044 = vsel %vm1042, %v1043, %v1041
          %v1045 = vrsqrt.pop %v993
          %v1046 = vmul.f32 %v993, %v1045
          %vm1047 = vcmp.eq.f32.partialorder %v993, inf
          %v1048 = vsel %vm1047, %v993, %v1046
          %vm1049 = vcmp.eq.f32.partialorder %v993, 0.0
          %v1050 = vand.u32 %v993, 2147483648
          %v1051 = vsel %vm1049, %v1050, %v1048
          %v1052 = vrsqrt.pop %v994
          %v1053 = vmul.f32 %v994, %v1052
          %vm1054 = vcmp.eq.f32.partialorder %v994, inf
          %v1055 = vsel %vm1054, %v994, %v1053
          %vm1056 = vcmp.eq.f32.partialorder %v994, 0.0
          %v1057 = vand.u32 %v994, 2147483648
          %v1058 = vsel %vm1056, %v1057, %v1055
          %v1059 = vrsqrt.pop %v995
          %v1060 = vmul.f32 %v995, %v1059
          %vm1061 = vcmp.eq.f32.partialorder %v995, inf
          %v1062 = vsel %vm1061, %v995, %v1060
          %vm1063 = vcmp.eq.f32.partialorder %v995, 0.0
          %v1064 = vand.u32 %v995, 2147483648
          %v1065 = vsel %vm1063, %v1064, %v1062
          %v1066 = vrsqrt.pop %v996
          %v1067 = vmul.f32 %v996, %v1066
          %vm1068 = vcmp.eq.f32.partialorder %v996, inf
          %v1069 = vsel %vm1068, %v996, %v1067
          %vm1070 = vcmp.eq.f32.partialorder %v996, 0.0
          %v1071 = vand.u32 %v996, 2147483648
          %v1072 = vsel %vm1070, %v1071, %v1069
          %v1073 = vrsqrt.pop %v997
          %v1074 = vmul.f32 %v997, %v1073
          %vm1075 = vcmp.eq.f32.partialorder %v997, inf
          %v1076 = vsel %vm1075, %v997, %v1074
          %vm1077 = vcmp.eq.f32.partialorder %v997, 0.0
          %v1078 = vand.u32 %v997, 2147483648
          %v1079 = vsel %vm1077, %v1078, %v1076
          %v1080 = vrsqrt.pop %v998
          %v1081 = vmul.f32 %v998, %v1080
          %vm1082 = vcmp.eq.f32.partialorder %v998, inf
          %v1083 = vsel %vm1082, %v998, %v1081
          %vm1084 = vcmp.eq.f32.partialorder %v998, 0.0
          %v1085 = vand.u32 %v998, 2147483648
          %v1086 = vsel %vm1084, %v1085, %v1083
          %v1087 = vrsqrt.pop %v999
          %v1088 = vmul.f32 %v999, %v1087
          %vm1089 = vcmp.eq.f32.partialorder %v999, inf
          %v1090 = vsel %vm1089, %v999, %v1088
          %vm1091 = vcmp.eq.f32.partialorder %v999, 0.0
          %v1092 = vand.u32 %v999, 2147483648
          %v1093 = vsel %vm1091, %v1092, %v1090
          %v1094 = vrsqrt.pop %v1000
          %v1095 = vmul.f32 %v1000, %v1094
          %vm1096 = vcmp.eq.f32.partialorder %v1000, inf
          %v1097 = vsel %vm1096, %v1000, %v1095
          %vm1098 = vcmp.eq.f32.partialorder %v1000, 0.0
          %v1099 = vand.u32 %v1000, 2147483648
          %v1100 = vsel %vm1098, %v1099, %v1097
          %v1101 = vrsqrt.pop %v1001
          %v1102 = vmul.f32 %v1001, %v1101
          %vm1103 = vcmp.eq.f32.partialorder %v1001, inf
          %v1104 = vsel %vm1103, %v1001, %v1102
          %vm1105 = vcmp.eq.f32.partialorder %v1001, 0.0
          %v1106 = vand.u32 %v1001, 2147483648
          %v1107 = vsel %vm1105, %v1106, %v1104
          %v1108 = vrsqrt.pop %v1002
          %v1109 = vmul.f32 %v1002, %v1108
          %vm1110 = vcmp.eq.f32.partialorder %v1002, inf
          %v1111 = vsel %vm1110, %v1002, %v1109
          %vm1112 = vcmp.eq.f32.partialorder %v1002, 0.0
          %v1113 = vand.u32 %v1002, 2147483648
          %v1114 = vsel %vm1112, %v1113, %v1111
          %v1115 = vmul.f32 %v891, 0.5403023
          %v1116 = vmul.f32 %v892, 0.5403023
          %v1117 = vmul.f32 %v893, 0.5403023
          %v1118 = vmul.f32 %v894, 0.5403023
          %v1119 = vmul.f32 %v895, 0.5403023
          %v1120 = vmul.f32 %v896, 0.5403023
          %v1121 = vmul.f32 %v897, 0.5403023
          %v1122 = vmul.f32 %v898, 0.5403023
          %v1123 = vmul.f32 %v899, 0.5403023
          %v1124 = vmul.f32 %v900, 0.5403023
          %v1125 = vmul.f32 %v901, 0.5403023
          %v1126 = vmul.f32 %v902, 0.5403023
          %v1127 = vmul.f32 %v903, 0.5403023
          %v1128 = vmul.f32 %v904, 0.5403023
          %v1129 = vmul.f32 %v905, 0.5403023
          %v1130 = vmul.f32 %v906, 0.5403023
          %v1131 = vmul.f32 %v1009, 0.84147096
          %v1132 = vmul.f32 %v1016, 0.84147096
          %v1133 = vmul.f32 %v1023, 0.84147096
          %v1134 = vmul.f32 %v1030, 0.84147096
          %v1135 = vmul.f32 %v1037, 0.84147096
          %v1136 = vmul.f32 %v1044, 0.84147096
          %v1137 = vmul.f32 %v1051, 0.84147096
          %v1138 = vmul.f32 %v1058, 0.84147096
          %v1139 = vmul.f32 %v1065, 0.84147096
          %v1140 = vmul.f32 %v1072, 0.84147096
          %v1141 = vmul.f32 %v1079, 0.84147096
          %v1142 = vmul.f32 %v1086, 0.84147096
          %v1143 = vmul.f32 %v1093, 0.84147096
          %v1144 = vmul.f32 %v1100, 0.84147096
          %v1145 = vmul.f32 %v1107, 0.84147096
          %v1146 = vmul.f32 %v1114, 0.84147096
          %v1147 = vsub.f32 %v1115, %v1131
          %v1148 = vsub.f32 %v1116, %v1132
          %v1149 = vsub.f32 %v1117, %v1133
          %v1150 = vsub.f32 %v1118, %v1134
          %v1151 = vsub.f32 %v1119, %v1135
          %v1152 = vsub.f32 %v1120, %v1136
          %v1153 = vsub.f32 %v1121, %v1137
          %v1154 = vsub.f32 %v1122, %v1138
          %v1155 = vsub.f32 %v1123, %v1139
          %v1156 = vsub.f32 %v1124, %v1140
          %v1157 = vsub.f32 %v1125, %v1141
          %v1158 = vsub.f32 %v1126, %v1142
          %v1159 = vsub.f32 %v1127, %v1143
          %v1160 = vsub.f32 %v1128, %v1144
          %v1161 = vsub.f32 %v1129, %v1145
          %v1162 = vsub.f32 %v1130, %v1146
          %v1163 = vmul.f32 %v1147, 10.0
          %v1164 = vmul.f32 %v1148, 10.0
          %v1165 = vmul.f32 %v1149, 10.0
          %v1166 = vmul.f32 %v1150, 10.0
          %v1167 = vmul.f32 %v1151, 10.0
          %v1168 = vmul.f32 %v1152, 10.0
          %v1169 = vmul.f32 %v1153, 10.0
          %v1170 = vmul.f32 %v1154, 10.0
          %v1171 = vmul.f32 %v1155, 10.0
          %v1172 = vmul.f32 %v1156, 10.0
          %v1173 = vmul.f32 %v1157, 10.0
          %v1174 = vmul.f32 %v1158, 10.0
          %v1175 = vmul.f32 %v1159, 10.0
          %v1176 = vmul.f32 %v1160, 10.0
          %v1177 = vmul.f32 %v1161, 10.0
          %v1178 = vmul.f32 %v1162, 10.0
          %1179 = vadd.xlane.f32.xlu0 %v924
          %v1180 = vpop.xlane.xlu0 %1179
          %1181 = vadd.xlane.f32.xlu0 %v926
          %v1182 = vpop.xlane.xlu0 %1181
          %1183 = vadd.xlane.f32.xlu0 %v928
          %v1184 = vpop.xlane.xlu0 %1183
          %1185 = vadd.xlane.f32.xlu0 %v930
          %v1186 = vpop.xlane.xlu0 %1185
          %1187 = vadd.xlane.f32.xlu0 %v932
          %v1188 = vpop.xlane.xlu0 %1187
          %1189 = vadd.xlane.f32.xlu0 %v934
          %v1190 = vpop.xlane.xlu0 %1189
          %1191 = vadd.xlane.f32.xlu0 %v936
          %v1192 = vpop.xlane.xlu0 %1191
          %1193 = vadd.xlane.f32.xlu0 %v938
          %v1194 = vpop.xlane.xlu0 %1193
          %1195 = vadd.xlane.f32.xlu0 %v940
          %v1196 = vpop.xlane.xlu0 %1195
          %1197 = vadd.xlane.f32.xlu0 %v942
          %v1198 = vpop.xlane.xlu0 %1197
          %1199 = vadd.xlane.f32.xlu0 %v944
          %v1200 = vpop.xlane.xlu0 %1199
          %1201 = vadd.xlane.f32.xlu0 %v946
          %v1202 = vpop.xlane.xlu0 %1201
          %1203 = vadd.xlane.f32.xlu0 %v948
          %v1204 = vpop.xlane.xlu0 %1203
          %1205 = vadd.xlane.f32.xlu0 %v950
          %v1206 = vpop.xlane.xlu0 %1205
          %1207 = vadd.xlane.f32.xlu0 %v952
          %v1208 = vpop.xlane.xlu0 %1207
          %1209 = vadd.xlane.f32.xlu0 %v954
          %v1210 = vpop.xlane.xlu0 %1209
          %1211 = vst [vmem:[#allocation3] sm:$0xff] %v924
          %1212 = vst [vmem:[#allocation3 + $0x8] sm:$0xff] %v926
          %1213 = vst [vmem:[#allocation3 + $0x10] sm:$0xff] %v928
          %1214 = vst [vmem:[#allocation3 + $0x18] sm:$0xff] %v930
          %1215 = vst [vmem:[#allocation3 + $0x20] sm:$0xff] %v932
          %1216 = vst [vmem:[#allocation3 + $0x28] sm:$0xff] %v934
          %1217 = vst [vmem:[#allocation3 + $0x30] sm:$0xff] %v936
          %1218 = vst [vmem:[#allocation3 + $0x38] sm:$0xff] %v938
          %1219 = vst [vmem:[#allocation3 + $0x40] sm:$0xff] %v940
          %1220 = vst [vmem:[#allocation3 + $0x48] sm:$0xff] %v942
          %1221 = vst [vmem:[#allocation3 + $0x50] sm:$0xff] %v944
          %1222 = vst [vmem:[#allocation3 + $0x58] sm:$0xff] %v946
          %1223 = vst [vmem:[#allocation3 + $0x60] sm:$0xff] %v948
          %1224 = vst [vmem:[#allocation3 + $0x68] sm:$0xff] %v950
          %1225 = vst [vmem:[#allocation3 + $0x70] sm:$0xff] %v952
          %1226 = vst [vmem:[#allocation3 + $0x78] sm:$0xff] %v954
          %1227 = vst [vmem:[#allocation5] sm:$0xff] %v1163
          %1228 = vst [vmem:[#allocation5 + $0x18] sm:$0xff] %v1164
          %1229 = vst [vmem:[#allocation5 + $0x30] sm:$0xff] %v1165
          %1230 = vst [vmem:[#allocation5 + $0x48] sm:$0xff] %v1166
          %1231 = vst [vmem:[#allocation5 + $0x60] sm:$0xff] %v1167
          %1232 = vst [vmem:[#allocation5 + $0x78] sm:$0xff] %v1168
          %1233 = vst [vmem:[#allocation5 + $0x90] sm:$0xff] %v1169
          %1234 = vst [vmem:[#allocation5 + $0xa8] sm:$0xff] %v1170
          %1235 = vst [vmem:[#allocation5 + $0xc0] sm:$0xff] %v1171
          %1236 = vst [vmem:[#allocation5 + $0xd8] sm:$0xff] %v1172
          %1237 = vst [vmem:[#allocation5 + $0xf0] sm:$0xff] %v1173
          %1238 = vst [vmem:[#allocation5 + $0x108] sm:$0xff] %v1174
          %1239 = vst [vmem:[#allocation5 + $0x120] sm:$0xff] %v1175
          %1240 = vst [vmem:[#allocation5 + $0x138] sm:$0xff] %v1176
          %1241 = vst [vmem:[#allocation5 + $0x150] sm:$0xff] %v1177
          %1242 = vst [vmem:[#allocation5 + $0x168] sm:$0xff] %v1178
          %s1243 = scalar_lea.vmem [#allocation3], 128
          %v1244 = vld [vmem:[%s1243] sm:$0xff]
          %v1245 = vld [vmem:[%s1243 + $0x8] sm:$0xff]
          %v1246 = vld [vmem:[%s1243 + $0x10] sm:$0xff]
          %v1247 = vld [vmem:[%s1243 + $0x18] sm:$0xff]
          %v1248 = vld [vmem:[%s1243 + $0x20] sm:$0xff]
          %v1249 = vld [vmem:[%s1243 + $0x28] sm:$0xff]
          %v1250 = vld [vmem:[%s1243 + $0x30] sm:$0xff]
          %v1251 = vld [vmem:[%s1243 + $0x38] sm:$0xff]
          %v1252 = vld [vmem:[%s1243 + $0x40] sm:$0xff]
          %v1253 = vld [vmem:[%s1243 + $0x48] sm:$0xff]
          %v1254 = vld [vmem:[%s1243 + $0x50] sm:$0xff]
          %v1255 = vld [vmem:[%s1243 + $0x58] sm:$0xff]
          %v1256 = vld [vmem:[%s1243 + $0x60] sm:$0xff]
          %v1257 = vld [vmem:[%s1243 + $0x68] sm:$0xff]
          %v1258 = vld [vmem:[%s1243 + $0x70] sm:$0xff]
          %v1259 = vld [vmem:[%s1243 + $0x78] sm:$0xff]
          %v1260 = vmul.f32 %v1244, 10.0
          %v1261 = vmul.f32 %v1245, 10.0
          %v1262 = vmul.f32 %v1246, 10.0
          %v1263 = vmul.f32 %v1247, 10.0
          %v1264 = vmul.f32 %v1248, 10.0
          %v1265 = vmul.f32 %v1249, 10.0
          %v1266 = vmul.f32 %v1250, 10.0
          %v1267 = vmul.f32 %v1251, 10.0
          %v1268 = vmul.f32 %v1252, 10.0
          %v1269 = vmul.f32 %v1253, 10.0
          %v1270 = vmul.f32 %v1254, 10.0
          %v1271 = vmul.f32 %v1255, 10.0
          %v1272 = vmul.f32 %v1256, 10.0
          %v1273 = vmul.f32 %v1257, 10.0
          %v1274 = vmul.f32 %v1258, 10.0
          %v1275 = vmul.f32 %v1259, 10.0
          %v1276 = vmul.f32 %v1260, 1.442695
          %v1277 = vpow.pop %v1276
          %v1278 = vmul.f32 %v1261, 1.442695
          %v1279 = vpow.pop %v1278
          %v1280 = vmul.f32 %v1262, 1.442695
          %v1281 = vpow.pop %v1280
          %v1282 = vmul.f32 %v1263, 1.442695
          %v1283 = vpow.pop %v1282
          %v1284 = vmul.f32 %v1264, 1.442695
          %v1285 = vpow.pop %v1284
          %v1286 = vmul.f32 %v1265, 1.442695
          %v1287 = vpow.pop %v1286
          %v1288 = vmul.f32 %v1266, 1.442695
          %v1289 = vpow.pop %v1288
          %v1290 = vmul.f32 %v1267, 1.442695
          %v1291 = vpow.pop %v1290
          %v1292 = vmul.f32 %v1268, 1.442695
          %v1293 = vpow.pop %v1292
          %v1294 = vmul.f32 %v1269, 1.442695
          %v1295 = vpow.pop %v1294
          %v1296 = vmul.f32 %v1270, 1.442695
          %v1297 = vpow.pop %v1296
          %v1298 = vmul.f32 %v1271, 1.442695
          %v1299 = vpow.pop %v1298
          %v1300 = vmul.f32 %v1272, 1.442695
          %v1301 = vpow.pop %v1300
          %v1302 = vmul.f32 %v1273, 1.442695
          %v1303 = vpow.pop %v1302
          %v1304 = vmul.f32 %v1274, 1.442695
          %v1305 = vpow.pop %v1304
          %v1306 = vmul.f32 %v1275, 1.442695
          %v1307 = vpow.pop %v1306
          %v1308 = vmul.f32 %v1244, %v1244
          %v1309 = vmul.f32 %v1245, %v1245
          %v1310 = vmul.f32 %v1246, %v1246
          %v1311 = vmul.f32 %v1247, %v1247
          %v1312 = vmul.f32 %v1248, %v1248
          %v1313 = vmul.f32 %v1249, %v1249
          %v1314 = vmul.f32 %v1250, %v1250
          %v1315 = vmul.f32 %v1251, %v1251
          %v1316 = vmul.f32 %v1252, %v1252
          %v1317 = vmul.f32 %v1253, %v1253
          %v1318 = vmul.f32 %v1254, %v1254
          %v1319 = vmul.f32 %v1255, %v1255
          %v1320 = vmul.f32 %v1256, %v1256
          %v1321 = vmul.f32 %v1257, %v1257
          %v1322 = vmul.f32 %v1258, %v1258
          %v1323 = vmul.f32 %v1259, %v1259
          %v1324 = vsub.f32 1.0, %v1308
          %v1325 = vsub.f32 1.0, %v1309
          %v1326 = vsub.f32 1.0, %v1310
          %v1327 = vsub.f32 1.0, %v1311
          %v1328 = vsub.f32 1.0, %v1312
          %v1329 = vsub.f32 1.0, %v1313
          %v1330 = vsub.f32 1.0, %v1314
          %v1331 = vsub.f32 1.0, %v1315
          %v1332 = vsub.f32 1.0, %v1316
          %v1333 = vsub.f32 1.0, %v1317
          %v1334 = vsub.f32 1.0, %v1318
          %v1335 = vsub.f32 1.0, %v1319
          %v1336 = vsub.f32 1.0, %v1320
          %v1337 = vsub.f32 1.0, %v1321
          %v1338 = vsub.f32 1.0, %v1322
          %v1339 = vsub.f32 1.0, %v1323
          %v1340 = vmax.f32 %v1324, 0.0
          %v1341 = vmax.f32 %v1325, 0.0
          %v1342 = vmax.f32 %v1326, 0.0
          %v1343 = vmax.f32 %v1327, 0.0
          %v1344 = vmax.f32 %v1328, 0.0
          %v1345 = vmax.f32 %v1329, 0.0
          %v1346 = vmax.f32 %v1330, 0.0
          %v1347 = vmax.f32 %v1331, 0.0
          %v1348 = vmax.f32 %v1332, 0.0
          %v1349 = vmax.f32 %v1333, 0.0
          %v1350 = vmax.f32 %v1334, 0.0
          %v1351 = vmax.f32 %v1335, 0.0
          %v1352 = vmax.f32 %v1336, 0.0
          %v1353 = vmax.f32 %v1337, 0.0
          %v1354 = vmax.f32 %v1338, 0.0
          %v1355 = vmax.f32 %v1339, 0.0
          %v1356 = vrsqrt.pop %v1340
          %v1357 = vmul.f32 %v1340, %v1356
          %vm1358 = vcmp.eq.f32.partialorder %v1340, inf
          %v1359 = vsel %vm1358, %v1340, %v1357
          %vm1360 = vcmp.eq.f32.partialorder %v1340, 0.0
          %v1361 = vand.u32 %v1340, 2147483648
          %v1362 = vsel %vm1360, %v1361, %v1359
          %v1363 = vrsqrt.pop %v1341
          %v1364 = vmul.f32 %v1341, %v1363
          %vm1365 = vcmp.eq.f32.partialorder %v1341, inf
          %v1366 = vsel %vm1365, %v1341, %v1364
          %vm1367 = vcmp.eq.f32.partialorder %v1341, 0.0
          %v1368 = vand.u32 %v1341, 2147483648
          %v1369 = vsel %vm1367, %v1368, %v1366
          %v1370 = vrsqrt.pop %v1342
          %v1371 = vmul.f32 %v1342, %v1370
          %vm1372 = vcmp.eq.f32.partialorder %v1342, inf
          %v1373 = vsel %vm1372, %v1342, %v1371
          %vm1374 = vcmp.eq.f32.partialorder %v1342, 0.0
          %v1375 = vand.u32 %v1342, 2147483648
          %v1376 = vsel %vm1374, %v1375, %v1373
          %v1377 = vrsqrt.pop %v1343
          %v1378 = vmul.f32 %v1343, %v1377
          %vm1379 = vcmp.eq.f32.partialorder %v1343, inf
          %v1380 = vsel %vm1379, %v1343, %v1378
          %vm1381 = vcmp.eq.f32.partialorder %v1343, 0.0
          %v1382 = vand.u32 %v1343, 2147483648
          %v1383 = vsel %vm1381, %v1382, %v1380
          %v1384 = vrsqrt.pop %v1344
          %v1385 = vmul.f32 %v1344, %v1384
          %vm1386 = vcmp.eq.f32.partialorder %v1344, inf
          %v1387 = vsel %vm1386, %v1344, %v1385
          %vm1388 = vcmp.eq.f32.partialorder %v1344, 0.0
          %v1389 = vand.u32 %v1344, 2147483648
          %v1390 = vsel %vm1388, %v1389, %v1387
          %v1391 = vrsqrt.pop %v1345
          %v1392 = vmul.f32 %v1345, %v1391
          %vm1393 = vcmp.eq.f32.partialorder %v1345, inf
          %v1394 = vsel %vm1393, %v1345, %v1392
          %vm1395 = vcmp.eq.f32.partialorder %v1345, 0.0
          %v1396 = vand.u32 %v1345, 2147483648
          %v1397 = vsel %vm1395, %v1396, %v1394
          %v1398 = vrsqrt.pop %v1346
          %v1399 = vmul.f32 %v1346, %v1398
          %vm1400 = vcmp.eq.f32.partialorder %v1346, inf
          %v1401 = vsel %vm1400, %v1346, %v1399
          %vm1402 = vcmp.eq.f32.partialorder %v1346, 0.0
          %v1403 = vand.u32 %v1346, 2147483648
          %v1404 = vsel %vm1402, %v1403, %v1401
          %v1405 = vrsqrt.pop %v1347
          %v1406 = vmul.f32 %v1347, %v1405
          %vm1407 = vcmp.eq.f32.partialorder %v1347, inf
          %v1408 = vsel %vm1407, %v1347, %v1406
          %vm1409 = vcmp.eq.f32.partialorder %v1347, 0.0
          %v1410 = vand.u32 %v1347, 2147483648
          %v1411 = vsel %vm1409, %v1410, %v1408
          %v1412 = vrsqrt.pop %v1348
          %v1413 = vmul.f32 %v1348, %v1412
          %vm1414 = vcmp.eq.f32.partialorder %v1348, inf
          %v1415 = vsel %vm1414, %v1348, %v1413
          %vm1416 = vcmp.eq.f32.partialorder %v1348, 0.0
          %v1417 = vand.u32 %v1348, 2147483648
          %v1418 = vsel %vm1416, %v1417, %v1415
          %v1419 = vrsqrt.pop %v1349
          %v1420 = vmul.f32 %v1349, %v1419
          %vm1421 = vcmp.eq.f32.partialorder %v1349, inf
          %v1422 = vsel %vm1421, %v1349, %v1420
          %vm1423 = vcmp.eq.f32.partialorder %v1349, 0.0
          %v1424 = vand.u32 %v1349, 2147483648
          %v1425 = vsel %vm1423, %v1424, %v1422
          %v1426 = vrsqrt.pop %v1350
          %v1427 = vmul.f32 %v1350, %v1426
          %vm1428 = vcmp.eq.f32.partialorder %v1350, inf
          %v1429 = vsel %vm1428, %v1350, %v1427
          %vm1430 = vcmp.eq.f32.partialorder %v1350, 0.0
          %v1431 = vand.u32 %v1350, 2147483648
          %v1432 = vsel %vm1430, %v1431, %v1429
          %v1433 = vrsqrt.pop %v1351
          %v1434 = vmul.f32 %v1351, %v1433
          %vm1435 = vcmp.eq.f32.partialorder %v1351, inf
          %v1436 = vsel %vm1435, %v1351, %v1434
          %vm1437 = vcmp.eq.f32.partialorder %v1351, 0.0
          %v1438 = vand.u32 %v1351, 2147483648
          %v1439 = vsel %vm1437, %v1438, %v1436
          %v1440 = vrsqrt.pop %v1352
          %v1441 = vmul.f32 %v1352, %v1440
          %vm1442 = vcmp.eq.f32.partialorder %v1352, inf
          %v1443 = vsel %vm1442, %v1352, %v1441
          %vm1444 = vcmp.eq.f32.partialorder %v1352, 0.0
          %v1445 = vand.u32 %v1352, 2147483648
          %v1446 = vsel %vm1444, %v1445, %v1443
          %v1447 = vrsqrt.pop %v1353
          %v1448 = vmul.f32 %v1353, %v1447
          %vm1449 = vcmp.eq.f32.partialorder %v1353, inf
          %v1450 = vsel %vm1449, %v1353, %v1448
          %vm1451 = vcmp.eq.f32.partialorder %v1353, 0.0
          %v1452 = vand.u32 %v1353, 2147483648
          %v1453 = vsel %vm1451, %v1452, %v1450
          %v1454 = vrsqrt.pop %v1354
          %v1455 = vmul.f32 %v1354, %v1454
          %vm1456 = vcmp.eq.f32.partialorder %v1354, inf
          %v1457 = vsel %vm1456, %v1354, %v1455
          %vm1458 = vcmp.eq.f32.partialorder %v1354, 0.0
          %v1459 = vand.u32 %v1354, 2147483648
          %v1460 = vsel %vm1458, %v1459, %v1457
          %v1461 = vrsqrt.pop %v1355
          %v1462 = vmul.f32 %v1355, %v1461
          %vm1463 = vcmp.eq.f32.partialorder %v1355, inf
          %v1464 = vsel %vm1463, %v1355, %v1462
          %vm1465 = vcmp.eq.f32.partialorder %v1355, 0.0
          %v1466 = vand.u32 %v1355, 2147483648
          %v1467 = vsel %vm1465, %v1466, %v1464
          %v1468 = vmul.f32 %v1244, 0.5403023
          %v1469 = vmul.f32 %v1245, 0.5403023
          %v1470 = vmul.f32 %v1246, 0.5403023
          %v1471 = vmul.f32 %v1247, 0.5403023
          %v1472 = vmul.f32 %v1248, 0.5403023
          %v1473 = vmul.f32 %v1249, 0.5403023
          %v1474 = vmul.f32 %v1250, 0.5403023
          %v1475 = vmul.f32 %v1251, 0.5403023
          %v1476 = vmul.f32 %v1252, 0.5403023
          %v1477 = vmul.f32 %v1253, 0.5403023
          %v1478 = vmul.f32 %v1254, 0.5403023
          %v1479 = vmul.f32 %v1255, 0.5403023
          %v1480 = vmul.f32 %v1256, 0.5403023
          %v1481 = vmul.f32 %v1257, 0.5403023
          %v1482 = vmul.f32 %v1258, 0.5403023
          %v1483 = vmul.f32 %v1259, 0.5403023
          %v1484 = vmul.f32 %v1362, 0.84147096
          %v1485 = vmul.f32 %v1369, 0.84147096
          %v1486 = vmul.f32 %v1376, 0.84147096
          %v1487 = vmul.f32 %v1383, 0.84147096
          %v1488 = vmul.f32 %v1390, 0.84147096
          %v1489 = vmul.f32 %v1397, 0.84147096
          %v1490 = vmul.f32 %v1404, 0.84147096
          %v1491 = vmul.f32 %v1411, 0.84147096
          %v1492 = vmul.f32 %v1418, 0.84147096
          %v1493 = vmul.f32 %v1425, 0.84147096
          %v1494 = vmul.f32 %v1432, 0.84147096
          %v1495 = vmul.f32 %v1439, 0.84147096
          %v1496 = vmul.f32 %v1446, 0.84147096
          %v1497 = vmul.f32 %v1453, 0.84147096
          %v1498 = vmul.f32 %v1460, 0.84147096
          %v1499 = vmul.f32 %v1467, 0.84147096
          %v1500 = vsub.f32 %v1468, %v1484
          %v1501 = vsub.f32 %v1469, %v1485
          %v1502 = vsub.f32 %v1470, %v1486
          %v1503 = vsub.f32 %v1471, %v1487
          %v1504 = vsub.f32 %v1472, %v1488
          %v1505 = vsub.f32 %v1473, %v1489
          %v1506 = vsub.f32 %v1474, %v1490
          %v1507 = vsub.f32 %v1475, %v1491
          %v1508 = vsub.f32 %v1476, %v1492
          %v1509 = vsub.f32 %v1477, %v1493
          %v1510 = vsub.f32 %v1478, %v1494
          %v1511 = vsub.f32 %v1479, %v1495
          %v1512 = vsub.f32 %v1480, %v1496
          %v1513 = vsub.f32 %v1481, %v1497
          %v1514 = vsub.f32 %v1482, %v1498
          %v1515 = vsub.f32 %v1483, %v1499
          %v1516 = vmul.f32 %v1500, 10.0
          %v1517 = vmul.f32 %v1501, 10.0
          %v1518 = vmul.f32 %v1502, 10.0
          %v1519 = vmul.f32 %v1503, 10.0
          %v1520 = vmul.f32 %v1504, 10.0
          %v1521 = vmul.f32 %v1505, 10.0
          %v1522 = vmul.f32 %v1506, 10.0
          %v1523 = vmul.f32 %v1507, 10.0
          %v1524 = vmul.f32 %v1508, 10.0
          %v1525 = vmul.f32 %v1509, 10.0
          %v1526 = vmul.f32 %v1510, 10.0
          %v1527 = vmul.f32 %v1511, 10.0
          %v1528 = vmul.f32 %v1512, 10.0
          %v1529 = vmul.f32 %v1513, 10.0
          %v1530 = vmul.f32 %v1514, 10.0
          %v1531 = vmul.f32 %v1515, 10.0
          %1532 = vadd.xlane.f32.xlu0 %v1277
          %v1533 = vpop.xlane.xlu0 %1532
          %1534 = vadd.xlane.f32.xlu0 %v1279
          %v1535 = vpop.xlane.xlu0 %1534
          %1536 = vadd.xlane.f32.xlu0 %v1281
          %v1537 = vpop.xlane.xlu0 %1536
          %1538 = vadd.xlane.f32.xlu0 %v1283
          %v1539 = vpop.xlane.xlu0 %1538
          %1540 = vadd.xlane.f32.xlu0 %v1285
          %v1541 = vpop.xlane.xlu0 %1540
          %1542 = vadd.xlane.f32.xlu0 %v1287
          %v1543 = vpop.xlane.xlu0 %1542
          %1544 = vadd.xlane.f32.xlu0 %v1289
          %v1545 = vpop.xlane.xlu0 %1544
          %1546 = vadd.xlane.f32.xlu0 %v1291
          %v1547 = vpop.xlane.xlu0 %1546
          %1548 = vadd.xlane.f32.xlu0 %v1293
          %v1549 = vpop.xlane.xlu0 %1548
          %1550 = vadd.xlane.f32.xlu0 %v1295
          %v1551 = vpop.xlane.xlu0 %1550
          %1552 = vadd.xlane.f32.xlu0 %v1297
          %v1553 = vpop.xlane.xlu0 %1552
          %1554 = vadd.xlane.f32.xlu0 %v1299
          %v1555 = vpop.xlane.xlu0 %1554
          %1556 = vadd.xlane.f32.xlu0 %v1301
          %v1557 = vpop.xlane.xlu0 %1556
          %1558 = vadd.xlane.f32.xlu0 %v1303
          %v1559 = vpop.xlane.xlu0 %1558
          %1560 = vadd.xlane.f32.xlu0 %v1305
          %v1561 = vpop.xlane.xlu0 %1560
          %1562 = vadd.xlane.f32.xlu0 %v1307
          %v1563 = vpop.xlane.xlu0 %1562
          %v1564 = vadd.f32 %v1180, %v1533
          %v1565 = vadd.f32 %v1182, %v1535
          %v1566 = vadd.f32 %v1184, %v1537
          %v1567 = vadd.f32 %v1186, %v1539
          %v1568 = vadd.f32 %v1188, %v1541
          %v1569 = vadd.f32 %v1190, %v1543
          %v1570 = vadd.f32 %v1192, %v1545
          %v1571 = vadd.f32 %v1194, %v1547
          %v1572 = vadd.f32 %v1196, %v1549
          %v1573 = vadd.f32 %v1198, %v1551
          %v1574 = vadd.f32 %v1200, %v1553
          %v1575 = vadd.f32 %v1202, %v1555
          %v1576 = vadd.f32 %v1204, %v1557
          %v1577 = vadd.f32 %v1206, %v1559
          %v1578 = vadd.f32 %v1208, %v1561
          %v1579 = vadd.f32 %v1210, %v1563
          %1580 = vst [vmem:[%s1243] sm:$0xff] %v1277
          %1581 = vst [vmem:[%s1243 + $0x8] sm:$0xff] %v1279
          %1582 = vst [vmem:[%s1243 + $0x10] sm:$0xff] %v1281
          %1583 = vst [vmem:[%s1243 + $0x18] sm:$0xff] %v1283
          %1584 = vst [vmem:[%s1243 + $0x20] sm:$0xff] %v1285
          %1585 = vst [vmem:[%s1243 + $0x28] sm:$0xff] %v1287
          %1586 = vst [vmem:[%s1243 + $0x30] sm:$0xff] %v1289
          %1587 = vst [vmem:[%s1243 + $0x38] sm:$0xff] %v1291
          %1588 = vst [vmem:[%s1243 + $0x40] sm:$0xff] %v1293
          %1589 = vst [vmem:[%s1243 + $0x48] sm:$0xff] %v1295
          %1590 = vst [vmem:[%s1243 + $0x50] sm:$0xff] %v1297
          %1591 = vst [vmem:[%s1243 + $0x58] sm:$0xff] %v1299
          %1592 = vst [vmem:[%s1243 + $0x60] sm:$0xff] %v1301
          %1593 = vst [vmem:[%s1243 + $0x68] sm:$0xff] %v1303
          %1594 = vst [vmem:[%s1243 + $0x70] sm:$0xff] %v1305
          %1595 = vst [vmem:[%s1243 + $0x78] sm:$0xff] %v1307
          %1596 = vst [vmem:[#allocation5 + $0x8] sm:$0xff] %v1516
          %1597 = vst [vmem:[#allocation5 + $0x20] sm:$0xff] %v1517
          %1598 = vst [vmem:[#allocation5 + $0x38] sm:$0xff] %v1518
          %1599 = vst [vmem:[#allocation5 + $0x50] sm:$0xff] %v1519
          %1600 = vst [vmem:[#allocation5 + $0x68] sm:$0xff] %v1520
          %1601 = vst [vmem:[#allocation5 + $0x80] sm:$0xff] %v1521
          %1602 = vst [vmem:[#allocation5 + $0x98] sm:$0xff] %v1522
          %1603 = vst [vmem:[#allocation5 + $0xb0] sm:$0xff] %v1523
          %1604 = vst [vmem:[#allocation5 + $0xc8] sm:$0xff] %v1524
          %1605 = vst [vmem:[#allocation5 + $0xe0] sm:$0xff] %v1525
          %1606 = vst [vmem:[#allocation5 + $0xf8] sm:$0xff] %v1526
          %1607 = vst [vmem:[#allocation5 + $0x110] sm:$0xff] %v1527
          %1608 = vst [vmem:[#allocation5 + $0x128] sm:$0xff] %v1528
          %1609 = vst [vmem:[#allocation5 + $0x140] sm:$0xff] %v1529
          %1610 = vst [vmem:[#allocation5 + $0x158] sm:$0xff] %v1530
          %1611 = vst [vmem:[#allocation5 + $0x170] sm:$0xff] %v1531
          %s1612 = scalar_lea.vmem [#allocation3], 256
          %v1613 = vld [vmem:[%s1612] sm:$0xff]
          %v1614 = vld [vmem:[%s1612 + $0x8] sm:$0xff]
          %v1615 = vld [vmem:[%s1612 + $0x10] sm:$0xff]
          %v1616 = vld [vmem:[%s1612 + $0x18] sm:$0xff]
          %v1617 = vld [vmem:[%s1612 + $0x20] sm:$0xff]
          %v1618 = vld [vmem:[%s1612 + $0x28] sm:$0xff]
          %v1619 = vld [vmem:[%s1612 + $0x30] sm:$0xff]
          %v1620 = vld [vmem:[%s1612 + $0x38] sm:$0xff]
          %v1621 = vld [vmem:[%s1612 + $0x40] sm:$0xff]
          %v1622 = vld [vmem:[%s1612 + $0x48] sm:$0xff]
          %v1623 = vld [vmem:[%s1612 + $0x50] sm:$0xff]
          %v1624 = vld [vmem:[%s1612 + $0x58] sm:$0xff]
          %v1625 = vld [vmem:[%s1612 + $0x60] sm:$0xff]
          %v1626 = vld [vmem:[%s1612 + $0x68] sm:$0xff]
          %v1627 = vld [vmem:[%s1612 + $0x70] sm:$0xff]
          %v1628 = vld [vmem:[%s1612 + $0x78] sm:$0xff]
          %v1629 = vmul.f32 %v1613, 10.0
          %v1630 = vmul.f32 %v1614, 10.0
          %v1631 = vmul.f32 %v1615, 10.0
          %v1632 = vmul.f32 %v1616, 10.0
          %v1633 = vmul.f32 %v1617, 10.0
          %v1634 = vmul.f32 %v1618, 10.0
          %v1635 = vmul.f32 %v1619, 10.0
          %v1636 = vmul.f32 %v1620, 10.0
          %v1637 = vmul.f32 %v1621, 10.0
          %v1638 = vmul.f32 %v1622, 10.0
          %v1639 = vmul.f32 %v1623, 10.0
          %v1640 = vmul.f32 %v1624, 10.0
          %v1641 = vmul.f32 %v1625, 10.0
          %v1642 = vmul.f32 %v1626, 10.0
          %v1643 = vmul.f32 %v1627, 10.0
          %v1644 = vmul.f32 %v1628, 10.0
          %v1645 = vmul.f32 %v1629, 1.442695
          %v1646 = vpow.pop %v1645
          %v1647 = vmul.f32 %v1630, 1.442695
          %v1648 = vpow.pop %v1647
          %v1649 = vmul.f32 %v1631, 1.442695
          %v1650 = vpow.pop %v1649
          %v1651 = vmul.f32 %v1632, 1.442695
          %v1652 = vpow.pop %v1651
          %v1653 = vmul.f32 %v1633, 1.442695
          %v1654 = vpow.pop %v1653
          %v1655 = vmul.f32 %v1634, 1.442695
          %v1656 = vpow.pop %v1655
          %v1657 = vmul.f32 %v1635, 1.442695
          %v1658 = vpow.pop %v1657
          %v1659 = vmul.f32 %v1636, 1.442695
          %v1660 = vpow.pop %v1659
          %v1661 = vmul.f32 %v1637, 1.442695
          %v1662 = vpow.pop %v1661
          %v1663 = vmul.f32 %v1638, 1.442695
          %v1664 = vpow.pop %v1663
          %v1665 = vmul.f32 %v1639, 1.442695
          %v1666 = vpow.pop %v1665
          %v1667 = vmul.f32 %v1640, 1.442695
          %v1668 = vpow.pop %v1667
          %v1669 = vmul.f32 %v1641, 1.442695
          %v1670 = vpow.pop %v1669
          %v1671 = vmul.f32 %v1642, 1.442695
          %v1672 = vpow.pop %v1671
          %v1673 = vmul.f32 %v1643, 1.442695
          %v1674 = vpow.pop %v1673
          %v1675 = vmul.f32 %v1644, 1.442695
          %v1676 = vpow.pop %v1675
          %v1677 = vmul.f32 %v1613, %v1613
          %v1678 = vmul.f32 %v1614, %v1614
          %v1679 = vmul.f32 %v1615, %v1615
          %v1680 = vmul.f32 %v1616, %v1616
          %v1681 = vmul.f32 %v1617, %v1617
          %v1682 = vmul.f32 %v1618, %v1618
          %v1683 = vmul.f32 %v1619, %v1619
          %v1684 = vmul.f32 %v1620, %v1620
          %v1685 = vmul.f32 %v1621, %v1621
          %v1686 = vmul.f32 %v1622, %v1622
          %v1687 = vmul.f32 %v1623, %v1623
          %v1688 = vmul.f32 %v1624, %v1624
          %v1689 = vmul.f32 %v1625, %v1625
          %v1690 = vmul.f32 %v1626, %v1626
          %v1691 = vmul.f32 %v1627, %v1627
          %v1692 = vmul.f32 %v1628, %v1628
          %v1693 = vsub.f32 1.0, %v1677
          %v1694 = vsub.f32 1.0, %v1678
          %v1695 = vsub.f32 1.0, %v1679
          %v1696 = vsub.f32 1.0, %v1680
          %v1697 = vsub.f32 1.0, %v1681
          %v1698 = vsub.f32 1.0, %v1682
          %v1699 = vsub.f32 1.0, %v1683
          %v1700 = vsub.f32 1.0, %v1684
          %v1701 = vsub.f32 1.0, %v1685
          %v1702 = vsub.f32 1.0, %v1686
          %v1703 = vsub.f32 1.0, %v1687
          %v1704 = vsub.f32 1.0, %v1688
          %v1705 = vsub.f32 1.0, %v1689
          %v1706 = vsub.f32 1.0, %v1690
          %v1707 = vsub.f32 1.0, %v1691
          %v1708 = vsub.f32 1.0, %v1692
          %v1709 = vmax.f32 %v1693, 0.0
          %v1710 = vmax.f32 %v1694, 0.0
          %v1711 = vmax.f32 %v1695, 0.0
          %v1712 = vmax.f32 %v1696, 0.0
          %v1713 = vmax.f32 %v1697, 0.0
          %v1714 = vmax.f32 %v1698, 0.0
          %v1715 = vmax.f32 %v1699, 0.0
          %v1716 = vmax.f32 %v1700, 0.0
          %v1717 = vmax.f32 %v1701, 0.0
          %v1718 = vmax.f32 %v1702, 0.0
          %v1719 = vmax.f32 %v1703, 0.0
          %v1720 = vmax.f32 %v1704, 0.0
          %v1721 = vmax.f32 %v1705, 0.0
          %v1722 = vmax.f32 %v1706, 0.0
          %v1723 = vmax.f32 %v1707, 0.0
          %v1724 = vmax.f32 %v1708, 0.0
          %v1725 = vrsqrt.pop %v1709
          %v1726 = vmul.f32 %v1709, %v1725
          %vm1727 = vcmp.eq.f32.partialorder %v1709, inf
          %v1728 = vsel %vm1727, %v1709, %v1726
          %vm1729 = vcmp.eq.f32.partialorder %v1709, 0.0
          %v1730 = vand.u32 %v1709, 2147483648
          %v1731 = vsel %vm1729, %v1730, %v1728
          %v1732 = vrsqrt.pop %v1710
          %v1733 = vmul.f32 %v1710, %v1732
          %vm1734 = vcmp.eq.f32.partialorder %v1710, inf
          %v1735 = vsel %vm1734, %v1710, %v1733
          %vm1736 = vcmp.eq.f32.partialorder %v1710, 0.0
          %v1737 = vand.u32 %v1710, 2147483648
          %v1738 = vsel %vm1736, %v1737, %v1735
          %v1739 = vrsqrt.pop %v1711
          %v1740 = vmul.f32 %v1711, %v1739
          %vm1741 = vcmp.eq.f32.partialorder %v1711, inf
          %v1742 = vsel %vm1741, %v1711, %v1740
          %vm1743 = vcmp.eq.f32.partialorder %v1711, 0.0
          %v1744 = vand.u32 %v1711, 2147483648
          %v1745 = vsel %vm1743, %v1744, %v1742
          %v1746 = vrsqrt.pop %v1712
          %v1747 = vmul.f32 %v1712, %v1746
          %vm1748 = vcmp.eq.f32.partialorder %v1712, inf
          %v1749 = vsel %vm1748, %v1712, %v1747
          %vm1750 = vcmp.eq.f32.partialorder %v1712, 0.0
          %v1751 = vand.u32 %v1712, 2147483648
          %v1752 = vsel %vm1750, %v1751, %v1749
          %v1753 = vrsqrt.pop %v1713
          %v1754 = vmul.f32 %v1713, %v1753
          %vm1755 = vcmp.eq.f32.partialorder %v1713, inf
          %v1756 = vsel %vm1755, %v1713, %v1754
          %vm1757 = vcmp.eq.f32.partialorder %v1713, 0.0
          %v1758 = vand.u32 %v1713, 2147483648
          %v1759 = vsel %vm1757, %v1758, %v1756
          %v1760 = vrsqrt.pop %v1714
          %v1761 = vmul.f32 %v1714, %v1760
          %vm1762 = vcmp.eq.f32.partialorder %v1714, inf
          %v1763 = vsel %vm1762, %v1714, %v1761
          %vm1764 = vcmp.eq.f32.partialorder %v1714, 0.0
          %v1765 = vand.u32 %v1714, 2147483648
          %v1766 = vsel %vm1764, %v1765, %v1763
          %v1767 = vrsqrt.pop %v1715
          %v1768 = vmul.f32 %v1715, %v1767
          %vm1769 = vcmp.eq.f32.partialorder %v1715, inf
          %v1770 = vsel %vm1769, %v1715, %v1768
          %vm1771 = vcmp.eq.f32.partialorder %v1715, 0.0
          %v1772 = vand.u32 %v1715, 2147483648
          %v1773 = vsel %vm1771, %v1772, %v1770
          %v1774 = vrsqrt.pop %v1716
          %v1775 = vmul.f32 %v1716, %v1774
          %vm1776 = vcmp.eq.f32.partialorder %v1716, inf
          %v1777 = vsel %vm1776, %v1716, %v1775
          %vm1778 = vcmp.eq.f32.partialorder %v1716, 0.0
          %v1779 = vand.u32 %v1716, 2147483648
          %v1780 = vsel %vm1778, %v1779, %v1777
          %v1781 = vrsqrt.pop %v1717
          %v1782 = vmul.f32 %v1717, %v1781
          %vm1783 = vcmp.eq.f32.partialorder %v1717, inf
          %v1784 = vsel %vm1783, %v1717, %v1782
          %vm1785 = vcmp.eq.f32.partialorder %v1717, 0.0
          %v1786 = vand.u32 %v1717, 2147483648
          %v1787 = vsel %vm1785, %v1786, %v1784
          %v1788 = vrsqrt.pop %v1718
          %v1789 = vmul.f32 %v1718, %v1788
          %vm1790 = vcmp.eq.f32.partialorder %v1718, inf
          %v1791 = vsel %vm1790, %v1718, %v1789
          %vm1792 = vcmp.eq.f32.partialorder %v1718, 0.0
          %v1793 = vand.u32 %v1718, 2147483648
          %v1794 = vsel %vm1792, %v1793, %v1791
          %v1795 = vrsqrt.pop %v1719
          %v1796 = vmul.f32 %v1719, %v1795
          %vm1797 = vcmp.eq.f32.partialorder %v1719, inf
          %v1798 = vsel %vm1797, %v1719, %v1796
          %vm1799 = vcmp.eq.f32.partialorder %v1719, 0.0
          %v1800 = vand.u32 %v1719, 2147483648
          %v1801 = vsel %vm1799, %v1800, %v1798
          %v1802 = vrsqrt.pop %v1720
          %v1803 = vmul.f32 %v1720, %v1802
          %vm1804 = vcmp.eq.f32.partialorder %v1720, inf
          %v1805 = vsel %vm1804, %v1720, %v1803
          %vm1806 = vcmp.eq.f32.partialorder %v1720, 0.0
          %v1807 = vand.u32 %v1720, 2147483648
          %v1808 = vsel %vm1806, %v1807, %v1805
          %v1809 = vrsqrt.pop %v1721
          %v1810 = vmul.f32 %v1721, %v1809
          %vm1811 = vcmp.eq.f32.partialorder %v1721, inf
          %v1812 = vsel %vm1811, %v1721, %v1810
          %vm1813 = vcmp.eq.f32.partialorder %v1721, 0.0
          %v1814 = vand.u32 %v1721, 2147483648
          %v1815 = vsel %vm1813, %v1814, %v1812
          %v1816 = vrsqrt.pop %v1722
          %v1817 = vmul.f32 %v1722, %v1816
          %vm1818 = vcmp.eq.f32.partialorder %v1722, inf
          %v1819 = vsel %vm1818, %v1722, %v1817
          %vm1820 = vcmp.eq.f32.partialorder %v1722, 0.0
          %v1821 = vand.u32 %v1722, 2147483648
          %v1822 = vsel %vm1820, %v1821, %v1819
          %v1823 = vrsqrt.pop %v1723
          %v1824 = vmul.f32 %v1723, %v1823
          %vm1825 = vcmp.eq.f32.partialorder %v1723, inf
          %v1826 = vsel %vm1825, %v1723, %v1824
          %vm1827 = vcmp.eq.f32.partialorder %v1723, 0.0
          %v1828 = vand.u32 %v1723, 2147483648
          %v1829 = vsel %vm1827, %v1828, %v1826
          %v1830 = vrsqrt.pop %v1724
          %v1831 = vmul.f32 %v1724, %v1830
          %vm1832 = vcmp.eq.f32.partialorder %v1724, inf
          %v1833 = vsel %vm1832, %v1724, %v1831
          %vm1834 = vcmp.eq.f32.partialorder %v1724, 0.0
          %v1835 = vand.u32 %v1724, 2147483648
          %v1836 = vsel %vm1834, %v1835, %v1833
          %v1837 = vmul.f32 %v1613, 0.5403023
          %v1838 = vmul.f32 %v1614, 0.5403023
          %v1839 = vmul.f32 %v1615, 0.5403023
          %v1840 = vmul.f32 %v1616, 0.5403023
          %v1841 = vmul.f32 %v1617, 0.5403023
          %v1842 = vmul.f32 %v1618, 0.5403023
          %v1843 = vmul.f32 %v1619, 0.5403023
          %v1844 = vmul.f32 %v1620, 0.5403023
          %v1845 = vmul.f32 %v1621, 0.5403023
          %v1846 = vmul.f32 %v1622, 0.5403023
          %v1847 = vmul.f32 %v1623, 0.5403023
          %v1848 = vmul.f32 %v1624, 0.5403023
          %v1849 = vmul.f32 %v1625, 0.5403023
          %v1850 = vmul.f32 %v1626, 0.5403023
          %v1851 = vmul.f32 %v1627, 0.5403023
          %v1852 = vmul.f32 %v1628, 0.5403023
          %v1853 = vmul.f32 %v1731, 0.84147096
          %v1854 = vmul.f32 %v1738, 0.84147096
          %v1855 = vmul.f32 %v1745, 0.84147096
          %v1856 = vmul.f32 %v1752, 0.84147096
          %v1857 = vmul.f32 %v1759, 0.84147096
          %v1858 = vmul.f32 %v1766, 0.84147096
          %v1859 = vmul.f32 %v1773, 0.84147096
          %v1860 = vmul.f32 %v1780, 0.84147096
          %v1861 = vmul.f32 %v1787, 0.84147096
          %v1862 = vmul.f32 %v1794, 0.84147096
          %v1863 = vmul.f32 %v1801, 0.84147096
          %v1864 = vmul.f32 %v1808, 0.84147096
          %v1865 = vmul.f32 %v1815, 0.84147096
          %v1866 = vmul.f32 %v1822, 0.84147096
          %v1867 = vmul.f32 %v1829, 0.84147096
          %v1868 = vmul.f32 %v1836, 0.84147096
          %v1869 = vsub.f32 %v1837, %v1853
          %v1870 = vsub.f32 %v1838, %v1854
          %v1871 = vsub.f32 %v1839, %v1855
          %v1872 = vsub.f32 %v1840, %v1856
          %v1873 = vsub.f32 %v1841, %v1857
          %v1874 = vsub.f32 %v1842, %v1858
          %v1875 = vsub.f32 %v1843, %v1859
          %v1876 = vsub.f32 %v1844, %v1860
          %v1877 = vsub.f32 %v1845, %v1861
          %v1878 = vsub.f32 %v1846, %v1862
          %v1879 = vsub.f32 %v1847, %v1863
          %v1880 = vsub.f32 %v1848, %v1864
          %v1881 = vsub.f32 %v1849, %v1865
          %v1882 = vsub.f32 %v1850, %v1866
          %v1883 = vsub.f32 %v1851, %v1867
          %v1884 = vsub.f32 %v1852, %v1868
          %v1885 = vmul.f32 %v1869, 10.0
          %v1886 = vmul.f32 %v1870, 10.0
          %v1887 = vmul.f32 %v1871, 10.0
          %v1888 = vmul.f32 %v1872, 10.0
          %v1889 = vmul.f32 %v1873, 10.0
          %v1890 = vmul.f32 %v1874, 10.0
          %v1891 = vmul.f32 %v1875, 10.0
          %v1892 = vmul.f32 %v1876, 10.0
          %v1893 = vmul.f32 %v1877, 10.0
          %v1894 = vmul.f32 %v1878, 10.0
          %v1895 = vmul.f32 %v1879, 10.0
          %v1896 = vmul.f32 %v1880, 10.0
          %v1897 = vmul.f32 %v1881, 10.0
          %v1898 = vmul.f32 %v1882, 10.0
          %v1899 = vmul.f32 %v1883, 10.0
          %v1900 = vmul.f32 %v1884, 10.0
          %1901 = vadd.xlane.f32.xlu0 %v1646
          %v1902 = vpop.xlane.xlu0 %1901
          %1903 = vadd.xlane.f32.xlu0 %v1648
          %v1904 = vpop.xlane.xlu0 %1903
          %1905 = vadd.xlane.f32.xlu0 %v1650
          %v1906 = vpop.xlane.xlu0 %1905
          %1907 = vadd.xlane.f32.xlu0 %v1652
          %v1908 = vpop.xlane.xlu0 %1907
          %1909 = vadd.xlane.f32.xlu0 %v1654
          %v1910 = vpop.xlane.xlu0 %1909
          %1911 = vadd.xlane.f32.xlu0 %v1656
          %v1912 = vpop.xlane.xlu0 %1911
          %1913 = vadd.xlane.f32.xlu0 %v1658
          %v1914 = vpop.xlane.xlu0 %1913
          %1915 = vadd.xlane.f32.xlu0 %v1660
          %v1916 = vpop.xlane.xlu0 %1915
          %1917 = vadd.xlane.f32.xlu0 %v1662
          %v1918 = vpop.xlane.xlu0 %1917
          %1919 = vadd.xlane.f32.xlu0 %v1664
          %v1920 = vpop.xlane.xlu0 %1919
          %1921 = vadd.xlane.f32.xlu0 %v1666
          %v1922 = vpop.xlane.xlu0 %1921
          %1923 = vadd.xlane.f32.xlu0 %v1668
          %v1924 = vpop.xlane.xlu0 %1923
          %1925 = vadd.xlane.f32.xlu0 %v1670
          %v1926 = vpop.xlane.xlu0 %1925
          %1927 = vadd.xlane.f32.xlu0 %v1672
          %v1928 = vpop.xlane.xlu0 %1927
          %1929 = vadd.xlane.f32.xlu0 %v1674
          %v1930 = vpop.xlane.xlu0 %1929
          %1931 = vadd.xlane.f32.xlu0 %v1676
          %v1932 = vpop.xlane.xlu0 %1931
          %v1933 = vadd.f32 %v1564, %v1902
          %v1934 = vadd.f32 %v1565, %v1904
          %v1935 = vadd.f32 %v1566, %v1906
          %v1936 = vadd.f32 %v1567, %v1908
          %v1937 = vadd.f32 %v1568, %v1910
          %v1938 = vadd.f32 %v1569, %v1912
          %v1939 = vadd.f32 %v1570, %v1914
          %v1940 = vadd.f32 %v1571, %v1916
          %v1941 = vadd.f32 %v1572, %v1918
          %v1942 = vadd.f32 %v1573, %v1920
          %v1943 = vadd.f32 %v1574, %v1922
          %v1944 = vadd.f32 %v1575, %v1924
          %v1945 = vadd.f32 %v1576, %v1926
          %v1946 = vadd.f32 %v1577, %v1928
          %v1947 = vadd.f32 %v1578, %v1930
          %v1948 = vadd.f32 %v1579, %v1932
          %1949 = vst [vmem:[%s1612] sm:$0xff] %v1646
          %1950 = vst [vmem:[%s1612 + $0x8] sm:$0xff] %v1648
          %1951 = vst [vmem:[%s1612 + $0x10] sm:$0xff] %v1650
          %1952 = vst [vmem:[%s1612 + $0x18] sm:$0xff] %v1652
          %1953 = vst [vmem:[%s1612 + $0x20] sm:$0xff] %v1654
          %1954 = vst [vmem:[%s1612 + $0x28] sm:$0xff] %v1656
          %1955 = vst [vmem:[%s1612 + $0x30] sm:$0xff] %v1658
          %1956 = vst [vmem:[%s1612 + $0x38] sm:$0xff] %v1660
          %1957 = vst [vmem:[%s1612 + $0x40] sm:$0xff] %v1662
          %1958 = vst [vmem:[%s1612 + $0x48] sm:$0xff] %v1664
          %1959 = vst [vmem:[%s1612 + $0x50] sm:$0xff] %v1666
          %1960 = vst [vmem:[%s1612 + $0x58] sm:$0xff] %v1668
          %1961 = vst [vmem:[%s1612 + $0x60] sm:$0xff] %v1670
          %1962 = vst [vmem:[%s1612 + $0x68] sm:$0xff] %v1672
          %1963 = vst [vmem:[%s1612 + $0x70] sm:$0xff] %v1674
          %1964 = vst [vmem:[%s1612 + $0x78] sm:$0xff] %v1676
          %1965 = vst [vmem:[#allocation5 + $0x10] sm:$0xff] %v1885
          %1966 = vst [vmem:[#allocation5 + $0x28] sm:$0xff] %v1886
          %1967 = vst [vmem:[#allocation5 + $0x40] sm:$0xff] %v1887
          %1968 = vst [vmem:[#allocation5 + $0x58] sm:$0xff] %v1888
          %1969 = vst [vmem:[#allocation5 + $0x70] sm:$0xff] %v1889
          %1970 = vst [vmem:[#allocation5 + $0x88] sm:$0xff] %v1890
          %1971 = vst [vmem:[#allocation5 + $0xa0] sm:$0xff] %v1891
          %1972 = vst [vmem:[#allocation5 + $0xb8] sm:$0xff] %v1892
          %1973 = vst [vmem:[#allocation5 + $0xd0] sm:$0xff] %v1893
          %1974 = vst [vmem:[#allocation5 + $0xe8] sm:$0xff] %v1894
          %1975 = vst [vmem:[#allocation5 + $0x100] sm:$0xff] %v1895
          %1976 = vst [vmem:[#allocation5 + $0x118] sm:$0xff] %v1896
          %1977 = vst [vmem:[#allocation5 + $0x130] sm:$0xff] %v1897
          %1978 = vst [vmem:[#allocation5 + $0x148] sm:$0xff] %v1898
          %1979 = vst [vmem:[#allocation5 + $0x160] sm:$0xff] %v1899
          %1980 = vst [vmem:[#allocation5 + $0x178] sm:$0xff] %v1900
          %v1981 = vsub.f32 %v1933, 84.0
          %v1982 = vsub.f32 %v1934, 84.0
          %v1983 = vsub.f32 %v1935, 84.0
          %v1984 = vsub.f32 %v1936, 84.0
          %v1985 = vsub.f32 %v1937, 84.0
          %v1986 = vsub.f32 %v1938, 84.0
          %v1987 = vsub.f32 %v1939, 84.0
          %v1988 = vsub.f32 %v1940, 84.0
          %v1989 = vsub.f32 %v1941, 84.0
          %v1990 = vsub.f32 %v1942, 84.0
          %v1991 = vsub.f32 %v1943, 84.0
          %v1992 = vsub.f32 %v1944, 84.0
          %v1993 = vsub.f32 %v1945, 84.0
          %v1994 = vsub.f32 %v1946, 84.0
          %v1995 = vsub.f32 %v1947, 84.0
          %v1996 = vsub.f32 %v1948, 84.0
          %v1997 = vld [vmem:[#allocation3] sm:$0xff]
          %v1998 = vld [vmem:[#allocation3 + $0x8] sm:$0xff]
          %v1999 = vld [vmem:[#allocation3 + $0x10] sm:$0xff]
          %v2000 = vld [vmem:[#allocation3 + $0x18] sm:$0xff]
          %v2001 = vld [vmem:[#allocation3 + $0x20] sm:$0xff]
          %v2002 = vld [vmem:[#allocation3 + $0x28] sm:$0xff]
          %v2003 = vld [vmem:[#allocation3 + $0x30] sm:$0xff]
          %v2004 = vld [vmem:[#allocation3 + $0x38] sm:$0xff]
          %v2005 = vld [vmem:[#allocation3 + $0x40] sm:$0xff]
          %v2006 = vld [vmem:[#allocation3 + $0x48] sm:$0xff]
          %v2007 = vld [vmem:[#allocation3 + $0x50] sm:$0xff]
          %v2008 = vld [vmem:[#allocation3 + $0x58] sm:$0xff]
          %v2009 = vld [vmem:[#allocation3 + $0x60] sm:$0xff]
          %v2010 = vld [vmem:[#allocation3 + $0x68] sm:$0xff]
          %v2011 = vld [vmem:[#allocation3 + $0x70] sm:$0xff]
          %v2012 = vld [vmem:[#allocation3 + $0x78] sm:$0xff]
          %v2013 = vld [vmem:[#allocation5] sm:$0xff]
          %v2014 = vld [vmem:[#allocation5 + $0x18] sm:$0xff]
          %v2015 = vld [vmem:[#allocation5 + $0x30] sm:$0xff]
          %v2016 = vld [vmem:[#allocation5 + $0x48] sm:$0xff]
          %v2017 = vld [vmem:[#allocation5 + $0x60] sm:$0xff]
          %v2018 = vld [vmem:[#allocation5 + $0x78] sm:$0xff]
          %v2019 = vld [vmem:[#allocation5 + $0x90] sm:$0xff]
          %v2020 = vld [vmem:[#allocation5 + $0xa8] sm:$0xff]
          %v2021 = vld [vmem:[#allocation5 + $0xc0] sm:$0xff]
          %v2022 = vld [vmem:[#allocation5 + $0xd8] sm:$0xff]
          %v2023 = vld [vmem:[#allocation5 + $0xf0] sm:$0xff]
          %v2024 = vld [vmem:[#allocation5 + $0x108] sm:$0xff]
          %v2025 = vld [vmem:[#allocation5 + $0x120] sm:$0xff]
          %v2026 = vld [vmem:[#allocation5 + $0x138] sm:$0xff]
          %v2027 = vld [vmem:[#allocation5 + $0x150] sm:$0xff]
          %v2028 = vld [vmem:[#allocation5 + $0x168] sm:$0xff]
          %v2029 = vmul.f32 %v2013, 1.442695
          %v2030 = vpow.pop %v2029
          %v2031 = vmul.f32 %v2014, 1.442695
          %v2032 = vpow.pop %v2031
          %v2033 = vmul.f32 %v2015, 1.442695
          %v2034 = vpow.pop %v2033
          %v2035 = vmul.f32 %v2016, 1.442695
          %v2036 = vpow.pop %v2035
          %v2037 = vmul.f32 %v2017, 1.442695
          %v2038 = vpow.pop %v2037
          %v2039 = vmul.f32 %v2018, 1.442695
          %v2040 = vpow.pop %v2039
          %v2041 = vmul.f32 %v2019, 1.442695
          %v2042 = vpow.pop %v2041
          %v2043 = vmul.f32 %v2020, 1.442695
          %v2044 = vpow.pop %v2043
          %v2045 = vmul.f32 %v2021, 1.442695
          %v2046 = vpow.pop %v2045
          %v2047 = vmul.f32 %v2022, 1.442695
          %v2048 = vpow.pop %v2047
          %v2049 = vmul.f32 %v2023, 1.442695
          %v2050 = vpow.pop %v2049
          %v2051 = vmul.f32 %v2024, 1.442695
          %v2052 = vpow.pop %v2051
          %v2053 = vmul.f32 %v2025, 1.442695
          %v2054 = vpow.pop %v2053
          %v2055 = vmul.f32 %v2026, 1.442695
          %v2056 = vpow.pop %v2055
          %v2057 = vmul.f32 %v2027, 1.442695
          %v2058 = vpow.pop %v2057
          %v2059 = vmul.f32 %v2028, 1.442695
          %v2060 = vpow.pop %v2059
          %v2061 = vsub.f32 %v1981, %v1997
          %v2062 = vsub.f32 %v1982, %v1998
          %v2063 = vsub.f32 %v1983, %v1999
          %v2064 = vsub.f32 %v1984, %v2000
          %v2065 = vsub.f32 %v1985, %v2001
          %v2066 = vsub.f32 %v1986, %v2002
          %v2067 = vsub.f32 %v1987, %v2003
          %v2068 = vsub.f32 %v1988, %v2004
          %v2069 = vsub.f32 %v1989, %v2005
          %v2070 = vsub.f32 %v1990, %v2006
          %v2071 = vsub.f32 %v1991, %v2007
          %v2072 = vsub.f32 %v1992, %v2008
          %v2073 = vsub.f32 %v1993, %v2009
          %v2074 = vsub.f32 %v1994, %v2010
          %v2075 = vsub.f32 %v1995, %v2011
          %v2076 = vsub.f32 %v1996, %v2012
          %v2077 = vadd.f32 %v2030, %v2061
          %v2078 = vadd.f32 %v2032, %v2062
          %v2079 = vadd.f32 %v2034, %v2063
          %v2080 = vadd.f32 %v2036, %v2064
          %v2081 = vadd.f32 %v2038, %v2065
          %v2082 = vadd.f32 %v2040, %v2066
          %v2083 = vadd.f32 %v2042, %v2067
          %v2084 = vadd.f32 %v2044, %v2068
          %v2085 = vadd.f32 %v2046, %v2069
          %v2086 = vadd.f32 %v2048, %v2070
          %v2087 = vadd.f32 %v2050, %v2071
          %v2088 = vadd.f32 %v2052, %v2072
          %v2089 = vadd.f32 %v2054, %v2073
          %v2090 = vadd.f32 %v2056, %v2074
          %v2091 = vadd.f32 %v2058, %v2075
          %v2092 = vadd.f32 %v2060, %v2076
          %v2093 = vlog2.pop %v2077
          %v2094 = vmul.f32 %v2093, 0.6931472
          %v2095 = vlog2.pop %v2078
          %v2096 = vmul.f32 %v2095, 0.6931472
          %v2097 = vlog2.pop %v2079
          %v2098 = vmul.f32 %v2097, 0.6931472
          %v2099 = vlog2.pop %v2080
          %v2100 = vmul.f32 %v2099, 0.6931472
          %v2101 = vlog2.pop %v2081
          %v2102 = vmul.f32 %v2101, 0.6931472
          %v2103 = vlog2.pop %v2082
          %v2104 = vmul.f32 %v2103, 0.6931472
          %v2105 = vlog2.pop %v2083
          %v2106 = vmul.f32 %v2105, 0.6931472
          %v2107 = vlog2.pop %v2084
          %v2108 = vmul.f32 %v2107, 0.6931472
          %v2109 = vlog2.pop %v2085
          %v2110 = vmul.f32 %v2109, 0.6931472
          %v2111 = vlog2.pop %v2086
          %v2112 = vmul.f32 %v2111, 0.6931472
          %v2113 = vlog2.pop %v2087
          %v2114 = vmul.f32 %v2113, 0.6931472
          %v2115 = vlog2.pop %v2088
          %v2116 = vmul.f32 %v2115, 0.6931472
          %v2117 = vlog2.pop %v2089
          %v2118 = vmul.f32 %v2117, 0.6931472
          %v2119 = vlog2.pop %v2090
          %v2120 = vmul.f32 %v2119, 0.6931472
          %v2121 = vlog2.pop %v2091
          %v2122 = vmul.f32 %v2121, 0.6931472
          %v2123 = vlog2.pop %v2092
          %v2124 = vmul.f32 %v2123, 0.6931472
          %v2125 = vsub.f32 %v2013, %v2094
          %v2126 = vsub.f32 %v2014, %v2096
          %v2127 = vsub.f32 %v2015, %v2098
          %v2128 = vsub.f32 %v2016, %v2100
          %v2129 = vsub.f32 %v2017, %v2102
          %v2130 = vsub.f32 %v2018, %v2104
          %v2131 = vsub.f32 %v2019, %v2106
          %v2132 = vsub.f32 %v2020, %v2108
          %v2133 = vsub.f32 %v2021, %v2110
          %v2134 = vsub.f32 %v2022, %v2112
          %v2135 = vsub.f32 %v2023, %v2114
          %v2136 = vsub.f32 %v2024, %v2116
          %v2137 = vsub.f32 %v2025, %v2118
          %v2138 = vsub.f32 %v2026, %v2120
          %v2139 = vsub.f32 %v2027, %v2122
          %v2140 = vsub.f32 %v2028, %v2124
          %2141 = vst [vmem:[#allocation5] sm:$0xff] %v2125
          %2142 = vst [vmem:[#allocation5 + $0x18] sm:$0xff] %v2126
          %2143 = vst [vmem:[#allocation5 + $0x30] sm:$0xff] %v2127
          %2144 = vst [vmem:[#allocation5 + $0x48] sm:$0xff] %v2128
          %2145 = vst [vmem:[#allocation5 + $0x60] sm:$0xff] %v2129
          %2146 = vst [vmem:[#allocation5 + $0x78] sm:$0xff] %v2130
          %2147 = vst [vmem:[#allocation5 + $0x90] sm:$0xff] %v2131
          %2148 = vst [vmem:[#allocation5 + $0xa8] sm:$0xff] %v2132
          %2149 = vst [vmem:[#allocation5 + $0xc0] sm:$0xff] %v2133
          %2150 = vst [vmem:[#allocation5 + $0xd8] sm:$0xff] %v2134
          %2151 = vst [vmem:[#allocation5 + $0xf0] sm:$0xff] %v2135
          %2152 = vst [vmem:[#allocation5 + $0x108] sm:$0xff] %v2136
          %2153 = vst [vmem:[#allocation5 + $0x120] sm:$0xff] %v2137
          %2154 = vst [vmem:[#allocation5 + $0x138] sm:$0xff] %v2138
          %2155 = vst [vmem:[#allocation5 + $0x150] sm:$0xff] %v2139
          %2156 = vst [vmem:[#allocation5 + $0x168] sm:$0xff] %v2140
          %v2157 = vld [vmem:[%s1243] sm:$0xff]
          %v2158 = vld [vmem:[%s1243 + $0x8] sm:$0xff]
          %v2159 = vld [vmem:[%s1243 + $0x10] sm:$0xff]
          %v2160 = vld [vmem:[%s1243 + $0x18] sm:$0xff]
          %v2161 = vld [vmem:[%s1243 + $0x20] sm:$0xff]
          %v2162 = vld [vmem:[%s1243 + $0x28] sm:$0xff]
          %v2163 = vld [vmem:[%s1243 + $0x30] sm:$0xff]
          %v2164 = vld [vmem:[%s1243 + $0x38] sm:$0xff]
          %v2165 = vld [vmem:[%s1243 + $0x40] sm:$0xff]
          %v2166 = vld [vmem:[%s1243 + $0x48] sm:$0xff]
          %v2167 = vld [vmem:[%s1243 + $0x50] sm:$0xff]
          %v2168 = vld [vmem:[%s1243 + $0x58] sm:$0xff]
          %v2169 = vld [vmem:[%s1243 + $0x60] sm:$0xff]
          %v2170 = vld [vmem:[%s1243 + $0x68] sm:$0xff]
          %v2171 = vld [vmem:[%s1243 + $0x70] sm:$0xff]
          %v2172 = vld [vmem:[%s1243 + $0x78] sm:$0xff]
          %v2173 = vld [vmem:[#allocation5 + $0x8] sm:$0xff]
          %v2174 = vld [vmem:[#allocation5 + $0x20] sm:$0xff]
          %v2175 = vld [vmem:[#allocation5 + $0x38] sm:$0xff]
          %v2176 = vld [vmem:[#allocation5 + $0x50] sm:$0xff]
          %v2177 = vld [vmem:[#allocation5 + $0x68] sm:$0xff]
          %v2178 = vld [vmem:[#allocation5 + $0x80] sm:$0xff]
          %v2179 = vld [vmem:[#allocation5 + $0x98] sm:$0xff]
          %v2180 = vld [vmem:[#allocation5 + $0xb0] sm:$0xff]
          %v2181 = vld [vmem:[#allocation5 + $0xc8] sm:$0xff]
          %v2182 = vld [vmem:[#allocation5 + $0xe0] sm:$0xff]
          %v2183 = vld [vmem:[#allocation5 + $0xf8] sm:$0xff]
          %v2184 = vld [vmem:[#allocation5 + $0x110] sm:$0xff]
          %v2185 = vld [vmem:[#allocation5 + $0x128] sm:$0xff]
          %v2186 = vld [vmem:[#allocation5 + $0x140] sm:$0xff]
          %v2187 = vld [vmem:[#allocation5 + $0x158] sm:$0xff]
          %v2188 = vld [vmem:[#allocation5 + $0x170] sm:$0xff]
          %v2189 = vmul.f32 %v2173, 1.442695
          %v2190 = vpow.pop %v2189
          %v2191 = vmul.f32 %v2174, 1.442695
          %v2192 = vpow.pop %v2191
          %v2193 = vmul.f32 %v2175, 1.442695
          %v2194 = vpow.pop %v2193
          %v2195 = vmul.f32 %v2176, 1.442695
          %v2196 = vpow.pop %v2195
          %v2197 = vmul.f32 %v2177, 1.442695
          %v2198 = vpow.pop %v2197
          %v2199 = vmul.f32 %v2178, 1.442695
          %v2200 = vpow.pop %v2199
          %v2201 = vmul.f32 %v2179, 1.442695
          %v2202 = vpow.pop %v2201
          %v2203 = vmul.f32 %v2180, 1.442695
          %v2204 = vpow.pop %v2203
          %v2205 = vmul.f32 %v2181, 1.442695
          %v2206 = vpow.pop %v2205
          %v2207 = vmul.f32 %v2182, 1.442695
          %v2208 = vpow.pop %v2207
          %v2209 = vmul.f32 %v2183, 1.442695
          %v2210 = vpow.pop %v2209
          %v2211 = vmul.f32 %v2184, 1.442695
          %v2212 = vpow.pop %v2211
          %v2213 = vmul.f32 %v2185, 1.442695
          %v2214 = vpow.pop %v2213
          %v2215 = vmul.f32 %v2186, 1.442695
          %v2216 = vpow.pop %v2215
          %v2217 = vmul.f32 %v2187, 1.442695
          %v2218 = vpow.pop %v2217
          %v2219 = vmul.f32 %v2188, 1.442695
          %v2220 = vpow.pop %v2219
          %v2221 = vsub.f32 %v1981, %v2157
          %v2222 = vsub.f32 %v1982, %v2158
          %v2223 = vsub.f32 %v1983, %v2159
          %v2224 = vsub.f32 %v1984, %v2160
          %v2225 = vsub.f32 %v1985, %v2161
          %v2226 = vsub.f32 %v1986, %v2162
          %v2227 = vsub.f32 %v1987, %v2163
          %v2228 = vsub.f32 %v1988, %v2164
          %v2229 = vsub.f32 %v1989, %v2165
          %v2230 = vsub.f32 %v1990, %v2166
          %v2231 = vsub.f32 %v1991, %v2167
          %v2232 = vsub.f32 %v1992, %v2168
          %v2233 = vsub.f32 %v1993, %v2169
          %v2234 = vsub.f32 %v1994, %v2170
          %v2235 = vsub.f32 %v1995, %v2171
          %v2236 = vsub.f32 %v1996, %v2172
          %v2237 = vadd.f32 %v2190, %v2221
          %v2238 = vadd.f32 %v2192, %v2222
          %v2239 = vadd.f32 %v2194, %v2223
          %v2240 = vadd.f32 %v2196, %v2224
          %v2241 = vadd.f32 %v2198, %v2225
          %v2242 = vadd.f32 %v2200, %v2226
          %v2243 = vadd.f32 %v2202, %v2227
          %v2244 = vadd.f32 %v2204, %v2228
          %v2245 = vadd.f32 %v2206, %v2229
          %v2246 = vadd.f32 %v2208, %v2230
          %v2247 = vadd.f32 %v2210, %v2231
          %v2248 = vadd.f32 %v2212, %v2232
          %v2249 = vadd.f32 %v2214, %v2233
          %v2250 = vadd.f32 %v2216, %v2234
          %v2251 = vadd.f32 %v2218, %v2235
          %v2252 = vadd.f32 %v2220, %v2236
          %v2253 = vlog2.pop %v2237
          %v2254 = vmul.f32 %v2253, 0.6931472
          %v2255 = vlog2.pop %v2238
          %v2256 = vmul.f32 %v2255, 0.6931472
          %v2257 = vlog2.pop %v2239
          %v2258 = vmul.f32 %v2257, 0.6931472
          %v2259 = vlog2.pop %v2240
          %v2260 = vmul.f32 %v2259, 0.6931472
          %v2261 = vlog2.pop %v2241
          %v2262 = vmul.f32 %v2261, 0.6931472
          %v2263 = vlog2.pop %v2242
          %v2264 = vmul.f32 %v2263, 0.6931472
          %v2265 = vlog2.pop %v2243
          %v2266 = vmul.f32 %v2265, 0.6931472
          %v2267 = vlog2.pop %v2244
          %v2268 = vmul.f32 %v2267, 0.6931472
          %v2269 = vlog2.pop %v2245
          %v2270 = vmul.f32 %v2269, 0.6931472
          %v2271 = vlog2.pop %v2246
          %v2272 = vmul.f32 %v2271, 0.6931472
          %v2273 = vlog2.pop %v2247
          %v2274 = vmul.f32 %v2273, 0.6931472
          %v2275 = vlog2.pop %v2248
          %v2276 = vmul.f32 %v2275, 0.6931472
          %v2277 = vlog2.pop %v2249
          %v2278 = vmul.f32 %v2277, 0.6931472
          %v2279 = vlog2.pop %v2250
          %v2280 = vmul.f32 %v2279, 0.6931472
          %v2281 = vlog2.pop %v2251
          %v2282 = vmul.f32 %v2281, 0.6931472
          %v2283 = vlog2.pop %v2252
          %v2284 = vmul.f32 %v2283, 0.6931472
          %v2285 = vsub.f32 %v2173, %v2254
          %v2286 = vsub.f32 %v2174, %v2256
          %v2287 = vsub.f32 %v2175, %v2258
          %v2288 = vsub.f32 %v2176, %v2260
          %v2289 = vsub.f32 %v2177, %v2262
          %v2290 = vsub.f32 %v2178, %v2264
          %v2291 = vsub.f32 %v2179, %v2266
          %v2292 = vsub.f32 %v2180, %v2268
          %v2293 = vsub.f32 %v2181, %v2270
          %v2294 = vsub.f32 %v2182, %v2272
          %v2295 = vsub.f32 %v2183, %v2274
          %v2296 = vsub.f32 %v2184, %v2276
          %v2297 = vsub.f32 %v2185, %v2278
          %v2298 = vsub.f32 %v2186, %v2280
          %v2299 = vsub.f32 %v2187, %v2282
          %v2300 = vsub.f32 %v2188, %v2284
          %2301 = vst [vmem:[#allocation5 + $0x8] sm:$0xff] %v2285
          %2302 = vst [vmem:[#allocation5 + $0x20] sm:$0xff] %v2286
          %2303 = vst [vmem:[#allocation5 + $0x38] sm:$0xff] %v2287
          %2304 = vst [vmem:[#allocation5 + $0x50] sm:$0xff] %v2288
          %2305 = vst [vmem:[#allocation5 + $0x68] sm:$0xff] %v2289
          %2306 = vst [vmem:[#allocation5 + $0x80] sm:$0xff] %v2290
          %2307 = vst [vmem:[#allocation5 + $0x98] sm:$0xff] %v2291
          %2308 = vst [vmem:[#allocation5 + $0xb0] sm:$0xff] %v2292
          %2309 = vst [vmem:[#allocation5 + $0xc8] sm:$0xff] %v2293
          %2310 = vst [vmem:[#allocation5 + $0xe0] sm:$0xff] %v2294
          %2311 = vst [vmem:[#allocation5 + $0xf8] sm:$0xff] %v2295
          %2312 = vst [vmem:[#allocation5 + $0x110] sm:$0xff] %v2296
          %2313 = vst [vmem:[#allocation5 + $0x128] sm:$0xff] %v2297
          %2314 = vst [vmem:[#allocation5 + $0x140] sm:$0xff] %v2298
          %2315 = vst [vmem:[#allocation5 + $0x158] sm:$0xff] %v2299
          %2316 = vst [vmem:[#allocation5 + $0x170] sm:$0xff] %v2300
          %v2317 = vld [vmem:[%s1612] sm:$0xff]
          %v2318 = vld [vmem:[%s1612 + $0x8] sm:$0xff]
          %v2319 = vld [vmem:[%s1612 + $0x10] sm:$0xff]
          %v2320 = vld [vmem:[%s1612 + $0x18] sm:$0xff]
          %v2321 = vld [vmem:[%s1612 + $0x20] sm:$0xff]
          %v2322 = vld [vmem:[%s1612 + $0x28] sm:$0xff]
          %v2323 = vld [vmem:[%s1612 + $0x30] sm:$0xff]
          %v2324 = vld [vmem:[%s1612 + $0x38] sm:$0xff]
          %v2325 = vld [vmem:[%s1612 + $0x40] sm:$0xff]
          %v2326 = vld [vmem:[%s1612 + $0x48] sm:$0xff]
          %v2327 = vld [vmem:[%s1612 + $0x50] sm:$0xff]
          %v2328 = vld [vmem:[%s1612 + $0x58] sm:$0xff]
          %v2329 = vld [vmem:[%s1612 + $0x60] sm:$0xff]
          %v2330 = vld [vmem:[%s1612 + $0x68] sm:$0xff]
          %v2331 = vld [vmem:[%s1612 + $0x70] sm:$0xff]
          %v2332 = vld [vmem:[%s1612 + $0x78] sm:$0xff]
          %v2333 = vld [vmem:[#allocation5 + $0x10] sm:$0xff]
          %v2334 = vld [vmem:[#allocation5 + $0x28] sm:$0xff]
          %v2335 = vld [vmem:[#allocation5 + $0x40] sm:$0xff]
          %v2336 = vld [vmem:[#allocation5 + $0x58] sm:$0xff]
          %v2337 = vld [vmem:[#allocation5 + $0x70] sm:$0xff]
          %v2338 = vld [vmem:[#allocation5 + $0x88] sm:$0xff]
          %v2339 = vld [vmem:[#allocation5 + $0xa0] sm:$0xff]
          %v2340 = vld [vmem:[#allocation5 + $0xb8] sm:$0xff]
          %v2341 = vld [vmem:[#allocation5 + $0xd0] sm:$0xff]
          %v2342 = vld [vmem:[#allocation5 + $0xe8] sm:$0xff]
          %v2343 = vld [vmem:[#allocation5 + $0x100] sm:$0xff]
          %v2344 = vld [vmem:[#allocation5 + $0x118] sm:$0xff]
          %v2345 = vld [vmem:[#allocation5 + $0x130] sm:$0xff]
          %v2346 = vld [vmem:[#allocation5 + $0x148] sm:$0xff]
          %v2347 = vld [vmem:[#allocation5 + $0x160] sm:$0xff]
          %v2348 = vld [vmem:[#allocation5 + $0x178] sm:$0xff]
          %v2349 = vmul.f32 %v2333, 1.442695
          %v2350 = vpow.pop %v2349
          %v2351 = vmul.f32 %v2334, 1.442695
          %v2352 = vpow.pop %v2351
          %v2353 = vmul.f32 %v2335, 1.442695
          %v2354 = vpow.pop %v2353
          %v2355 = vmul.f32 %v2336, 1.442695
          %v2356 = vpow.pop %v2355
          %v2357 = vmul.f32 %v2337, 1.442695
          %v2358 = vpow.pop %v2357
          %v2359 = vmul.f32 %v2338, 1.442695
          %v2360 = vpow.pop %v2359
          %v2361 = vmul.f32 %v2339, 1.442695
          %v2362 = vpow.pop %v2361
          %v2363 = vmul.f32 %v2340, 1.442695
          %v2364 = vpow.pop %v2363
          %v2365 = vmul.f32 %v2341, 1.442695
          %v2366 = vpow.pop %v2365
          %v2367 = vmul.f32 %v2342, 1.442695
          %v2368 = vpow.pop %v2367
          %v2369 = vmul.f32 %v2343, 1.442695
          %v2370 = vpow.pop %v2369
          %v2371 = vmul.f32 %v2344, 1.442695
          %v2372 = vpow.pop %v2371
          %v2373 = vmul.f32 %v2345, 1.442695
          %v2374 = vpow.pop %v2373
          %v2375 = vmul.f32 %v2346, 1.442695
          %v2376 = vpow.pop %v2375
          %v2377 = vmul.f32 %v2347, 1.442695
          %v2378 = vpow.pop %v2377
          %v2379 = vmul.f32 %v2348, 1.442695
          %v2380 = vpow.pop %v2379
          %v2381 = vsub.f32 %v1981, %v2317
          %v2382 = vsub.f32 %v1982, %v2318
          %v2383 = vsub.f32 %v1983, %v2319
          %v2384 = vsub.f32 %v1984, %v2320
          %v2385 = vsub.f32 %v1985, %v2321
          %v2386 = vsub.f32 %v1986, %v2322
          %v2387 = vsub.f32 %v1987, %v2323
          %v2388 = vsub.f32 %v1988, %v2324
          %v2389 = vsub.f32 %v1989, %v2325
          %v2390 = vsub.f32 %v1990, %v2326
          %v2391 = vsub.f32 %v1991, %v2327
          %v2392 = vsub.f32 %v1992, %v2328
          %v2393 = vsub.f32 %v1993, %v2329
          %v2394 = vsub.f32 %v1994, %v2330
          %v2395 = vsub.f32 %v1995, %v2331
          %v2396 = vsub.f32 %v1996, %v2332
          %v2397 = vadd.f32 %v2350, %v2381
          %v2398 = vadd.f32 %v2352, %v2382
          %v2399 = vadd.f32 %v2354, %v2383
          %v2400 = vadd.f32 %v2356, %v2384
          %v2401 = vadd.f32 %v2358, %v2385
          %v2402 = vadd.f32 %v2360, %v2386
          %v2403 = vadd.f32 %v2362, %v2387
          %v2404 = vadd.f32 %v2364, %v2388
          %v2405 = vadd.f32 %v2366, %v2389
          %v2406 = vadd.f32 %v2368, %v2390
          %v2407 = vadd.f32 %v2370, %v2391
          %v2408 = vadd.f32 %v2372, %v2392
          %v2409 = vadd.f32 %v2374, %v2393
          %v2410 = vadd.f32 %v2376, %v2394
          %v2411 = vadd.f32 %v2378, %v2395
          %v2412 = vadd.f32 %v2380, %v2396
          %v2413 = vlog2.pop %v2397
          %v2414 = vmul.f32 %v2413, 0.6931472
          %v2415 = vlog2.pop %v2398
          %v2416 = vmul.f32 %v2415, 0.6931472
          %v2417 = vlog2.pop %v2399
          %v2418 = vmul.f32 %v2417, 0.6931472
          %v2419 = vlog2.pop %v2400
          %v2420 = vmul.f32 %v2419, 0.6931472
          %v2421 = vlog2.pop %v2401
          %v2422 = vmul.f32 %v2421, 0.6931472
          %v2423 = vlog2.pop %v2402
          %v2424 = vmul.f32 %v2423, 0.6931472
          %v2425 = vlog2.pop %v2403
          %v2426 = vmul.f32 %v2425, 0.6931472
          %v2427 = vlog2.pop %v2404
          %v2428 = vmul.f32 %v2427, 0.6931472
          %v2429 = vlog2.pop %v2405
          %v2430 = vmul.f32 %v2429, 0.6931472
          %v2431 = vlog2.pop %v2406
          %v2432 = vmul.f32 %v2431, 0.6931472
          %v2433 = vlog2.pop %v2407
          %v2434 = vmul.f32 %v2433, 0.6931472
          %v2435 = vlog2.pop %v2408
          %v2436 = vmul.f32 %v2435, 0.6931472
          %v2437 = vlog2.pop %v2409
          %v2438 = vmul.f32 %v2437, 0.6931472
          %v2439 = vlog2.pop %v2410
          %v2440 = vmul.f32 %v2439, 0.6931472
          %v2441 = vlog2.pop %v2411
          %v2442 = vmul.f32 %v2441, 0.6931472
          %v2443 = vlog2.pop %v2412
          %v2444 = vmul.f32 %v2443, 0.6931472
          %v2445 = vsub.f32 %v2333, %v2414
          %v2446 = vsub.f32 %v2334, %v2416
          %v2447 = vsub.f32 %v2335, %v2418
          %v2448 = vsub.f32 %v2336, %v2420
          %v2449 = vsub.f32 %v2337, %v2422
          %v2450 = vsub.f32 %v2338, %v2424
          %v2451 = vsub.f32 %v2339, %v2426
          %v2452 = vsub.f32 %v2340, %v2428
          %v2453 = vsub.f32 %v2341, %v2430
          %v2454 = vsub.f32 %v2342, %v2432
          %v2455 = vsub.f32 %v2343, %v2434
          %v2456 = vsub.f32 %v2344, %v2436
          %v2457 = vsub.f32 %v2345, %v2438
          %v2458 = vsub.f32 %v2346, %v2440
          %v2459 = vsub.f32 %v2347, %v2442
          %v2460 = vsub.f32 %v2348, %v2444
          %2461 = vst [vmem:[#allocation5 + $0x10] sm:$0xff] %v2445
          %2462 = vst [vmem:[#allocation5 + $0x28] sm:$0xff] %v2446
          %2463 = vst [vmem:[#allocation5 + $0x40] sm:$0xff] %v2447
          %2464 = vst [vmem:[#allocation5 + $0x58] sm:$0xff] %v2448
          %2465 = vst [vmem:[#allocation5 + $0x70] sm:$0xff] %v2449
          %2466 = vst [vmem:[#allocation5 + $0x88] sm:$0xff] %v2450
          %2467 = vst [vmem:[#allocation5 + $0xa0] sm:$0xff] %v2451
          %2468 = vst [vmem:[#allocation5 + $0xb8] sm:$0xff] %v2452
          %2469 = vst [vmem:[#allocation5 + $0xd0] sm:$0xff] %v2453
          %2470 = vst [vmem:[#allocation5 + $0xe8] sm:$0xff] %v2454
          %2471 = vst [vmem:[#allocation5 + $0x100] sm:$0xff] %v2455
          %2472 = vst [vmem:[#allocation5 + $0x118] sm:$0xff] %v2456
          %2473 = vst [vmem:[#allocation5 + $0x130] sm:$0xff] %v2457
          %2474 = vst [vmem:[#allocation5 + $0x148] sm:$0xff] %v2458
          %2475 = vst [vmem:[#allocation5 + $0x160] sm:$0xff] %v2459
          %2476 = vst [vmem:[#allocation5 + $0x178] sm:$0xff] %v2460
        $region78: #{tpu_custom_call.1} parent=65 // pred_fallthru
          _
        // Predicated region
        $region79: #{tpu_custom_call.1} parent=65 // pred_check
          %p2477 = pneg %p123
        $region80: #{tpu_custom_call.1} parent=65 // pred_check_branch
          %2479 = sbr.rel (%p2477) target = $region82
        $region81: #{tpu_custom_call.1} parent=65 // pred_region
          %s2480 = smul.u32 16, %s19
          %s2482 = ssub.s32 6144, 6144
          %2483 = vsyncadd [#allocation6], %s2482
          %s2484 = smul.addr %s2480, 3
          %s2485 = smul.addr %s2484, 128
          %s2486 = scalar_lea.hbm %s3, %s2485
          %s2487 = sshll.u32 [#allocation5], 4
          %s2488 = int_to_ptr.vmem [resolvable:$true] %s2487
          %2493 = dma.vmem_to_hbm [thread:$0]  %s2488, 6144, %s2486, [#allocation6], 384, 384, 24
        $region82: #{tpu_custom_call.1} parent=65 // pred_fallthru
          _
        // Predicated region
        $region83: #{tpu_custom_call.1} parent=65 // pred_check
          %p2494 = pneg %p123
        $region84: #{tpu_custom_call.1} parent=65 // pred_check_branch
          %2496 = sbr.rel (%p2494) target = $region86
        $region85: #{tpu_custom_call.1} parent=65 // pred_region
          %2497 = dma.done [#allocation6], 6144
        $region86: #{tpu_custom_call.1} parent=65 // pred_fallthru
          _
      $region66: #{tpu_custom_call.1} parent=5 // pred_fallthru
        _
      %p2498 = scmp.le.s32.totalorder 2, %s10
      // Predicated region
      $region87: #{tpu_custom_call.1} parent=5 // pred_check
        %p2499 = pneg %p2498
      $region88: #{tpu_custom_call.1} parent=5 // pred_check_branch
        %2501 = sbr.rel (%p2499) target = $region90
      $region89: #{tpu_custom_call.1} parent=5 // pred_region
        %s2502 = ssub.s32 %s10, 2
      $region90: #{tpu_custom_call.1} parent=5 // pred_fallthru
        _
    $region6: #{tpu_custom_call.1} parent=1 // loop_footer
      %s14 = sadd.s32 1, %s10
    $region7: #{tpu_custom_call.1} parent=1 // loop_footer_branch
      %9 = sbr.rel target = $region3
    $region8: #{tpu_custom_call.1} parent=1 // loop_exit
      _
    %2503 = vsyncpa [#allocation6], 1
    %s2504 = scalar_lea.sflag [#allocation6], 1
    %2505 = vsyncpa %s2504, 1

</llo_original>
